<compile_context>
chip_gen: v7x
topology: tpu7x:2x2x1
jax: 0.10.0
libtpu: 0.0.40
codegen_flags: <defaults>
</compile_context>

<pallas_src>
import functools

import jax
import jax.numpy as jnp
from jax import lax
from jax.experimental import pallas as pl
from jax.experimental.pallas import tpu as pltpu


_VMEM_BUDGET_BYTES = 28 * 1024 * 1024   # target per-step working set
_VMEM_LIMIT_BYTES = 48 * 1024 * 1024    # scoped VMEM limit (headroom below the
                                        # 64 MiB physical VMEM of a v7x core)


def _rpn_head_kernel(xf_ref, xt_ref, xb_ref, wc_ref, bc_ref, wh_ref, bh_ref,
                     out_ref, acc_ref, *, W, TH, halo_rows):
    """One (batch element, row tile) per grid step.

    xf_ref : (1, C, TH*W)         row tile, channels major, spatial flattened (lane)
    xt_ref : (1, C, halo_rows, W) row block whose LAST row sits just above the tile
    xb_ref : (1, C, halo_rows, W) row block whose FIRST row sits just below the tile
    wc_ref : (3, 3, C, C)         3x3 conv weights [ky, kx, out, in], bf16
    bc_ref : (C, 1)   f32         conv bias
    wh_ref : (3A, C)  bf16        fused cls+bbox 1x1 weights (cls rows first)
    bh_ref : (3A, 1)  f32         fused cls+bbox bias
    out_ref: (1, 3A, TH*W)        fused output slab (NCHW-major, lane dense)
    acc_ref: (C, TH*W) f32        VMEM scratch accumulator for the 3x3 conv
    """
    C = xf_ref.shape[1]
    S = TH * W
    h_idx = pl.program_id(1)
    is_first = h_idx == 0
    is_last = h_idx == pl.num_programs(1) - 1

    # bf16 MXU operands; accumulation stays f32 via preferred_element_type.
    xin = xf_ref[0].astype(jnp.bfloat16)                           # (C, S)
    top = xt_ref[0, :, halo_rows - 1, :].astype(jnp.bfloat16)      # (C, W)
    bot = xb_ref[0, :, 0, :].astype(jnp.bfloat16)                  # (C, W)
    top = jnp.where(is_first, jnp.zeros_like(top), top)  # image border -> 0
    bot = jnp.where(is_last, jnp.zeros_like(bot), bot)

    # Row-shifted variants (value seen at (h+dy, w)), hoisted across dx taps.
    rows = {
        -1: jnp.concatenate([top, xin[:, :S - W]], axis=1),
        0: xin,
        1: jnp.concatenate([xin[:, W:], bot], axis=1),
    }

    col = lax.broadcasted_iota(jnp.int32, (1, S), 1) % W
    left_edge = col == 0           # (h, w-1) is outside the image
    right_edge = col == W - 1      # (h, w+1) is outside the image
    zero = jnp.zeros((), jnp.bfloat16)

    def col_shift(v, dx):
        # value seen at (h, w+dx); zero outside the image.
        if dx == 0:
            return v
        if dx == 1:
            s = jnp.concatenate([v[:, 1:], jnp.zeros((C, 1), v.dtype)], axis=1)
            return jnp.where(right_edge, zero, s)
        s = jnp.concatenate([jnp.zeros((C, 1), v.dtype), v[:, :S - 1]], axis=1)
        return jnp.where(left_edge, zero, s)

    # 3x3 conv as 9 shifted (C_out, C) @ (C, S) matmuls into the f32 scratch.
    acc_ref[...] = jnp.zeros_like(acc_ref)
    for dy in (-1, 0, 1):
        v = rows[dy]
        for dx in (-1, 0, 1):
            tap = col_shift(v, dx)                      # (C, S) bf16
            w_tap = wc_ref[dy + 1, dx + 1]              # (C, C) [out, in] bf16
            acc_ref[...] += jnp.dot(w_tap, tap,
                                    preferred_element_type=jnp.float32)

    # Bias + ReLU in f32, then the fused (cls | bbox) 1x1 head in one MXU pass.
    t = jnp.maximum(acc_ref[...] + bc_ref[...], 0.0)               # (C, S) f32
    head = jnp.dot(wh_ref[...], t.astype(jnp.bfloat16),
                   preferred_element_type=jnp.float32) + bh_ref[...]
    out_ref[0] = head.astype(out_ref.dtype)                        # (3A, S)


def _working_set_bytes(C, TH, W):
    # bf16 input tile (double buffered) + hoisted row variants / shifted taps
    # + f32 accumulator + f32 activations  ~= 20 bytes per C*TH*W element.
    return 20 * C * TH * W


def _choose_row_tile(C, H, W):
    """Rows handled per grid step.

    Valid row tiles must (a) evenly divide H, (b) be a multiple of 8, and
    (c) give a lane-aligned flattened block (TH*W % 128 == 0) so every
    BlockSpec stays (8,128)-compliant.  Small levels run as a single step.
    """
    if _working_set_bytes(C, H, W) <= _VMEM_BUDGET_BYTES:
        return H
    best = None
    for th in range(8, H, 8):
        if (H % th == 0 and (th * W) % 128 == 0
                and _working_set_bytes(C, th, W) <= _VMEM_BUDGET_BYTES):
            best = th
    # TODO(synk): ragged last-tile support when H has no suitable divisor.
    return best if best is not None else H


def _rpn_head_single(x_nchw, params, row_tile=None):
    """Runs the fused RPN head on one NCHW feature map; returns NCHW outputs."""
    wconv_k, bconv_k, whead_k, bhead_k = params
    N, C, H, W = x_nchw.shape
    A3 = whead_k.shape[0]                   # 3 * num_anchors (cls + 2*bbox)

    TH = _choose_row_tile(C, H, W) if row_tile is None else row_tile
    if (H % TH) or (TH != H and ((TH % 8) or ((TH * W) % 128))):
        TH = H                              # invalid override -> single tile
    nh = H // TH
    S = TH * W
    halo_rows = 8 if H % 8 == 0 else H
    ratio = TH // halo_rows
    max_row_block = H // halo_rows - 1

    x_flat = x_nchw.reshape(N, C, H * W)    # contiguous reshape: free, no copy

    kernel = functools.partial(_rpn_head_kernel, W=W, TH=TH,
                               halo_rows=halo_rows)

    out = pl.pallas_call(
        kernel,
        out_shape=jax.ShapeDtypeStruct((N, A3, H * W), x_nchw.dtype),
        grid=(N, nh),
        in_specs=[
            # current row tile, spatial flattened so the lane dim is TH*W
            pl.BlockSpec((1, C, S), lambda n, h: (n, 0, h)),
            # row block whose last row is the halo row just above the tile
            pl.BlockSpec((1, C, halo_rows, W),
                         lambda n, h: (n, 0, jnp.maximum(h * ratio - 1, 0), 0)),
            # row block whose first row is the halo row just below the tile
            pl.BlockSpec((1, C, halo_rows, W),
                         lambda n, h: (n, 0,
                                       jnp.minimum((h + 1) * ratio,
                                                   max_row_block), 0)),
            pl.BlockSpec((3, 3, C, C), lambda n, h: (0, 0, 0, 0)),
            pl.BlockSpec((C, 1), lambda n, h: (0, 0)),
            pl.BlockSpec((A3, C), lambda n, h: (0, 0)),
            pl.BlockSpec((A3, 1), lambda n, h: (0, 0)),
        ],
        out_specs=pl.BlockSpec((1, A3, S), lambda n, h: (n, 0, h)),
        scratch_shapes=[pltpu.VMEM((C, S), jnp.float32)],
        compiler_params=pltpu.CompilerParams(
            dimension_semantics=("parallel", "parallel"),
            vmem_limit_bytes=_VMEM_LIMIT_BYTES),
    )(x_flat, x_nchw, x_nchw, wconv_k, bconv_k, whead_k, bhead_k)

    out = out.reshape(N, A3, H, W)          # free reshape -> NCHW slab
    A = A3 // 3
    return out[:, :A], out[:, A:]           # logits (A ch), bbox_reg (2A ch)


def rpn_head_forward(features, params, row_tiles=None):
    """Mirrors RPNHead.forward: list of NCHW feature maps in,
    (list_of_logits, list_of_bbox_reg) out, each NCHW."""
    if row_tiles is None:
        row_tiles = [None] * len(features)
    logits, bbox_reg = [], []
    for feat, rt in zip(features, row_tiles):
        l, b = _rpn_head_single(feat, params, row_tile=rt)
        logits.append(l)
        bbox_reg.append(b)
    return logits, bbox_reg


def init_params(key, in_channels, num_anchors):
    """Matches RPNHead.__init__: normal(std=0.01) weights, zero biases.
    Returns (kernel_layout_params, pytorch_layout_params)."""
    k1, k2, k3 = jax.random.split(key, 3)
    C, A = in_channels, num_anchors
    wconv_oihw = 0.01 * jax.random.normal(k1, (C, C, 3, 3), jnp.float32)
    wcls_oihw = 0.01 * jax.random.normal(k2, (A, C, 1, 1), jnp.float32)
    wbox_oihw = 0.01 * jax.random.normal(k3, (2 * A, C, 1, 1), jnp.float32)
    bconv = jnp.zeros((C,), jnp.float32)
    bcls = jnp.zeros((A,), jnp.float32)
    bbox_b = jnp.zeros((2 * A,), jnp.float32)

    # Kernel layouts: 3x3 conv -> (ky, kx, out, in) bf16; 1x1 heads fused into
    # a single (3A, C) bf16 matrix (cls rows first) + (3A, 1) f32 bias.
    wconv_k = jnp.transpose(wconv_oihw, (2, 3, 0, 1)).astype(jnp.bfloat16)
    bconv_k = bconv.reshape(C, 1)
    whead_k = jnp.concatenate(
        [wcls_oihw[:, :, 0, 0], wbox_oihw[:, :, 0, 0]], axis=0
    ).astype(jnp.bfloat16)
    bhead_k = jnp.concatenate([bcls, bbox_b]).reshape(3 * A, 1)

    kernel_params = (wconv_k, bconv_k, whead_k, bhead_k)
    torch_params = (wconv_oihw, bconv, wcls_oihw, bcls, wbox_oihw, bbox_b)
    return kernel_params, torch_params


def rpn_head_reference(features, torch_params):
    """Pure-JAX (f32 lax.conv) reference replicating the PyTorch forward."""
    wconv, bconv, wcls, bcls, wbox, bbox_b = torch_params
    dn = ("NCHW", "OIHW", "NCHW")
    logits, bbox_reg = [], []
    for feat in features:
        t = lax.conv_general_dilated(feat, wconv, (1, 1), "SAME",
                                     dimension_numbers=dn)
        t = jax.nn.relu(t + bconv[None, :, None, None])
        cls = lax.conv_general_dilated(t, wcls, (1, 1), "VALID",
                                       dimension_numbers=dn)
        cls = cls + bcls[None, :, None, None]
        box = lax.conv_general_dilated(t, wbox, (1, 1), "VALID",
                                       dimension_numbers=dn)
        box = box + bbox_b[None, :, None, None]
        logits.append(cls)
        bbox_reg.append(box)
    return logits, bbox_reg


if __name__ == "__main__":
    in_channels = 4
    num_anchors = 3

    key = jax.random.PRNGKey(0)
    kp, kx1, kx2 = jax.random.split(key, 3)
    kernel_params, torch_params = init_params(kp, in_channels, num_anchors)

    # Two pyramid levels, NCHW, matching the PyTorch input convention.
    features = [
        jax.random.normal(kx1, (2, in_channels, 16, 16), jnp.float32),
        jax.random.normal(kx2, (2, in_channels, 8, 8), jnp.float32),
    ]

    # Force 2 row tiles on the 16x16 level so the halo / row-tiling path is
    # exercised; the 8x8 level runs as a single grid step.
    logits, bbox_reg = rpn_head_forward(features, kernel_params,
                                        row_tiles=[8, None])
    logits = [jax.block_until_ready(l) for l in logits]
    bbox_reg = [jax.block_until_ready(b) for b in bbox_reg]

    ref_logits, ref_bbox = rpn_head_reference(features, torch_params)
    for got, ref in zip(logits + bbox_reg, ref_logits + ref_bbox):
        assert got.shape == ref.shape, (got.shape, ref.shape)
        # bf16 MXU operands -> relaxed tolerance vs the pure-f32 reference.
        assert jnp.allclose(got, ref, atol=1e-3, rtol=2e-2), \
            float(jnp.max(jnp.abs(got - ref)))

    print("KERNEL_OK")
</pallas_src>

<mosaic_0001>
module attributes {stable_mosaic.version = 11 : i64} {
  func.func @_rpn_head_kernel(%arg0: i32, %arg1: i32, %arg2: memref<1x4x128xf32, #tpu.memory_space<vmem>>, %arg3: memref<1x4x8x16xf32, #tpu.memory_space<vmem>>, %arg4: memref<1x4x8x16xf32, #tpu.memory_space<vmem>>, %arg5: memref<3x3x4x4xbf16, #tpu.memory_space<vmem>>, %arg6: memref<4x1xf32, #tpu.memory_space<vmem>>, %arg7: memref<9x4xbf16, #tpu.memory_space<vmem>>, %arg8: memref<9x1xf32, #tpu.memory_space<vmem>>, %arg9: memref<1x9x128xf32, #tpu.memory_space<vmem>>, %arg10: memref<4x128xf32, #tpu.memory_space<vmem>>) attributes {dimension_semantics = [#tpu.dimension_semantics<parallel>, #tpu.dimension_semantics<parallel>], iteration_bounds = array<i64: 2, 2>, scalar_prefetch = 0 : i64, scratch_operands = 1 : i64, tpu.core_type = #tpu.core_type<tc>, window_params = [{transform_indices = @transform_0, window_bounds = array<i64: 1, 4, 128>}, {transform_indices = @transform_1, window_bounds = array<i64: 1, 4, 8, 16>}, {transform_indices = @transform_2, window_bounds = array<i64: 1, 4, 8, 16>}, {pipeline_mode = #tpu.pipeline_mode<synchronous>, transform_indices = @transform_3, window_bounds = array<i64: 3, 3, 4, 4>}, {pipeline_mode = #tpu.pipeline_mode<synchronous>, transform_indices = @transform_4, window_bounds = array<i64: 4, 1>}, {pipeline_mode = #tpu.pipeline_mode<synchronous>, transform_indices = @transform_5, window_bounds = array<i64: 9, 4>}, {pipeline_mode = #tpu.pipeline_mode<synchronous>, transform_indices = @transform_6, window_bounds = array<i64: 9, 1>}, {transform_indices = @transform_7, window_bounds = array<i64: 1, 9, 128>}]} {
    %c0_i32 = arith.constant 0 : i32
    %0 = arith.cmpi eq, %arg1, %c0_i32 : i32
    %c1_i32 = arith.constant 1 : i32
    %1 = arith.cmpi eq, %arg1, %c1_i32 : i32
    %c0 = arith.constant 0 : index
    %c0_0 = arith.constant 0 : index
    %c0_1 = arith.constant 0 : index
    %2 = vector.load %arg2[%c0, %c0_0, %c0_1] : memref<1x4x128xf32, #tpu.memory_space<vmem>>, vector<1x4x128xf32>
    %3 = vector.shape_cast %2 : vector<1x4x128xf32> to vector<4x128xf32>
    %4 = arith.truncf %3 : vector<4x128xf32> to vector<4x128xbf16>
    %c0_2 = arith.constant 0 : index
    %c0_3 = arith.constant 0 : index
    %c7 = arith.constant 7 : index
    %c0_4 = arith.constant 0 : index
    %5 = vector.load %arg3[%c0_2, %c0_3, %c7, %c0_4] : memref<1x4x8x16xf32, #tpu.memory_space<vmem>>, vector<1x4x1x16xf32>
    %6 = vector.shape_cast %5 : vector<1x4x1x16xf32> to vector<4x16xf32>
    %7 = arith.truncf %6 : vector<4x16xf32> to vector<4x16xbf16>
    %c0_5 = arith.constant 0 : index
    %c0_6 = arith.constant 0 : index
    %c0_7 = arith.constant 0 : index
    %c0_8 = arith.constant 0 : index
    %8 = vector.load %arg4[%c0_5, %c0_6, %c0_7, %c0_8] : memref<1x4x8x16xf32, #tpu.memory_space<vmem>>, vector<1x4x1x16xf32>
    %9 = vector.shape_cast %8 : vector<1x4x1x16xf32> to vector<4x16xf32>
    %10 = arith.truncf %9 : vector<4x16xf32> to vector<4x16xbf16>
    %cst = arith.constant 0.000000e+00 : bf16
    %11 = vector.broadcast %cst : bf16 to vector<4x16xbf16>
    %12 = arith.select %0, %11, %7 : vector<4x16xbf16>
    %cst_9 = arith.constant 0.000000e+00 : bf16
    %13 = vector.broadcast %cst_9 : bf16 to vector<4x16xbf16>
    %14 = arith.select %1, %13, %10 : vector<4x16xbf16>
    %15 = vector.extract_strided_slice %4 {offsets = [0, 0], sizes = [4, 112], strides = [1, 1]} : vector<4x128xbf16> to vector<4x112xbf16>
    %16 = tpu.concatenate %12, %15 in 1 : vector<4x16xbf16>, vector<4x112xbf16> -> vector<4x128xbf16>
    %17 = vector.extract_strided_slice %4 {offsets = [0, 16], sizes = [4, 112], strides = [1, 1]} : vector<4x128xbf16> to vector<4x112xbf16>
    %18 = tpu.concatenate %17, %14 in 1 : vector<4x112xbf16>, vector<4x16xbf16> -> vector<4x128xbf16>
    %19 = tpu.iota {dimensions = array<i32: 1>} : vector<1x128xi32>
    %c16_i32 = arith.constant 16 : i32
    %c0_i32_10 = arith.constant 0 : i32
    %20 = arith.cmpi eq, %c16_i32, %c0_i32_10 : i32
    %c1_i32_11 = arith.constant 1 : i32
    %21 = arith.select %20, %c1_i32_11, %c16_i32 : i32
    %22 = vector.broadcast %21 : i32 to vector<1x128xi32>
    %23 = arith.remsi %19, %22 : vector<1x128xi32>
    %c0_i32_12 = arith.constant 0 : i32
    %24 = vector.broadcast %c0_i32_12 : i32 to vector<1x128xi32>
    %25 = arith.cmpi ne, %23, %24 : vector<1x128xi32>
    %c0_i32_13 = arith.constant 0 : i32
    %26 = vector.broadcast %c0_i32_13 : i32 to vector<1x128xi32>
    %27 = arith.cmpi slt, %23, %26 : vector<1x128xi32>
    %c0_i32_14 = arith.constant 0 : i32
    %28 = arith.cmpi slt, %21, %c0_i32_14 : i32
    %29 = vector.broadcast %28 : i1 to vector<1x128xi1>
    %30 = vector.broadcast %29 : vector<1x128xi1> to vector<1x128xi1>
    %31 = arith.xori %27, %30 : vector<1x128xi1>
    %32 = arith.andi %31, %25 : vector<1x128xi1>
    %33 = vector.broadcast %21 : i32 to vector<1x128xi32>
    %34 = arith.addi %23, %33 : vector<1x128xi32>
    %35 = arith.select %32, %34, %23 : vector<1x128xi1>, vector<1x128xi32>
    %c0_i32_15 = arith.constant 0 : i32
    %36 = vector.broadcast %c0_i32_15 : i32 to vector<1x128xi32>
    %37 = arith.cmpi eq, %35, %36 : vector<1x128xi32>
    %c15_i32 = arith.constant 15 : i32
    %38 = vector.broadcast %c15_i32 : i32 to vector<1x128xi32>
    %39 = arith.cmpi eq, %35, %38 : vector<1x128xi32>
    %cst_16 = arith.constant 0.000000e+00 : f32
    %40 = vector.broadcast %cst_16 : f32 to vector<4x128xf32>
    %c0_17 = arith.constant 0 : index
    %c0_18 = arith.constant 0 : index
    %41 = vector.load %arg10[%c0_17, %c0_18] : memref<4x128xf32, #tpu.memory_space<vmem>>, vector<4x128xf32>
    tpu.vector_store %arg10[%c0_17, %c0_18], %40 {strides = array<i32>} : memref<4x128xf32, #tpu.memory_space<vmem>>, vector<4x128xf32>,
    %cst_19 = arith.constant 0.000000e+00 : bf16
    %42 = vector.broadcast %cst_19 : bf16 to vector<4x1xbf16>
    %43 = vector.extract_strided_slice %16 {offsets = [0, 0], sizes = [4, 127], strides = [1, 1]} : vector<4x128xbf16> to vector<4x127xbf16>
    %44 = tpu.concatenate %42, %43 in 1 : vector<4x1xbf16>, vector<4x127xbf16> -> vector<4x128xbf16>
    %cst_20 = arith.constant 0.000000e+00 : bf16
    %45 = vector.shape_cast %37 : vector<1x128xi1> to vector<1x128xi1>
    %46 = vector.broadcast %45 : vector<1x128xi1> to vector<4x128xi1>
    %47 = vector.broadcast %cst_20 : bf16 to vector<4x128xbf16>
    %48 = arith.select %46, %47, %44 : vector<4x128xi1>, vector<4x128xbf16>
    %c0_21 = arith.constant 0 : index
    %c0_22 = arith.constant 0 : index
    %c0_23 = arith.constant 0 : index
    %c0_24 = arith.constant 0 : index
    %49 = vector.load %arg5[%c0_21, %c0_22, %c0_23, %c0_24] : memref<3x3x4x4xbf16, #tpu.memory_space<vmem>>, vector<1x1x4x4xbf16>
    %50 = vector.shape_cast %49 : vector<1x1x4x4xbf16> to vector<4x4xbf16>
    %c0_25 = arith.constant 0 : index
    %c0_26 = arith.constant 0 : index
    %51 = vector.load %arg10[%c0_25, %c0_26] : memref<4x128xf32, #tpu.memory_space<vmem>>, vector<4x128xf32>
    %cst_27 = arith.constant dense<0.000000e+00> : vector<4x128xf32>
    %52 = tpu.matmul %50, %48, %cst_27 {dimension_numbers = #tpu.dot_dimension_numbers<[1], [0], [0], [1], [0, 0, 1, 1], [], []>} : vector<4x4xbf16>, vector<4x128xbf16>, vector<4x128xf32> -> vector<4x128xf32>
    %53 = arith.addf %51, %52 : vector<4x128xf32>
    %c0_28 = arith.constant 0 : index
    %c0_29 = arith.constant 0 : index
    %54 = vector.load %arg10[%c0_28, %c0_29] : memref<4x128xf32, #tpu.memory_space<vmem>>, vector<4x128xf32>
    tpu.vector_store %arg10[%c0_28, %c0_29], %53 {strides = array<i32>} : memref<4x128xf32, #tpu.memory_space<vmem>>, vector<4x128xf32>,
    %c0_30 = arith.constant 0 : index
    %c1 = arith.constant 1 : index
    %c0_31 = arith.constant 0 : index
    %c0_32 = arith.constant 0 : index
    %55 = vector.load %arg5[%c0_30, %c1, %c0_31, %c0_32] : memref<3x3x4x4xbf16, #tpu.memory_space<vmem>>, vector<1x1x4x4xbf16>
    %56 = vector.shape_cast %55 : vector<1x1x4x4xbf16> to vector<4x4xbf16>
    %c0_33 = arith.constant 0 : index
    %c0_34 = arith.constant 0 : index
    %57 = vector.load %arg10[%c0_33, %c0_34] : memref<4x128xf32, #tpu.memory_space<vmem>>, vector<4x128xf32>
    %cst_35 = arith.constant dense<0.000000e+00> : vector<4x128xf32>
    %58 = tpu.matmul %56, %16, %cst_35 {dimension_numbers = #tpu.dot_dimension_numbers<[1], [0], [0], [1], [0, 0, 1, 1], [], []>} : vector<4x4xbf16>, vector<4x128xbf16>, vector<4x128xf32> -> vector<4x128xf32>
    %59 = arith.addf %57, %58 : vector<4x128xf32>
    %c0_36 = arith.constant 0 : index
    %c0_37 = arith.constant 0 : index
    %60 = vector.load %arg10[%c0_36, %c0_37] : memref<4x128xf32, #tpu.memory_space<vmem>>, vector<4x128xf32>
    tpu.vector_store %arg10[%c0_36, %c0_37], %59 {strides = array<i32>} : memref<4x128xf32, #tpu.memory_space<vmem>>, vector<4x128xf32>,
    %61 = vector.extract_strided_slice %16 {offsets = [0, 1], sizes = [4, 127], strides = [1, 1]} : vector<4x128xbf16> to vector<4x127xbf16>
    %cst_38 = arith.constant 0.000000e+00 : bf16
    %62 = vector.broadcast %cst_38 : bf16 to vector<4x1xbf16>
    %63 = tpu.concatenate %61, %62 in 1 : vector<4x127xbf16>, vector<4x1xbf16> -> vector<4x128xbf16>
    %cst_39 = arith.constant 0.000000e+00 : bf16
    %64 = vector.shape_cast %39 : vector<1x128xi1> to vector<1x128xi1>
    %65 = vector.broadcast %64 : vector<1x128xi1> to vector<4x128xi1>
    %66 = vector.broadcast %cst_39 : bf16 to vector<4x128xbf16>
    %67 = arith.select %65, %66, %63 : vector<4x128xi1>, vector<4x128xbf16>
    %c0_40 = arith.constant 0 : index
    %c2 = arith.constant 2 : index
    %c0_41 = arith.constant 0 : index
    %c0_42 = arith.constant 0 : index
    %68 = vector.load %arg5[%c0_40, %c2, %c0_41, %c0_42] : memref<3x3x4x4xbf16, #tpu.memory_space<vmem>>, vector<1x1x4x4xbf16>
    %69 = vector.shape_cast %68 : vector<1x1x4x4xbf16> to vector<4x4xbf16>
    %c0_43 = arith.constant 0 : index
    %c0_44 = arith.constant 0 : index
    %70 = vector.load %arg10[%c0_43, %c0_44] : memref<4x128xf32, #tpu.memory_space<vmem>>, vector<4x128xf32>
    %cst_45 = arith.constant dense<0.000000e+00> : vector<4x128xf32>
    %71 = tpu.matmul %69, %67, %cst_45 {dimension_numbers = #tpu.dot_dimension_numbers<[1], [0], [0], [1], [0, 0, 1, 1], [], []>} : vector<4x4xbf16>, vector<4x128xbf16>, vector<4x128xf32> -> vector<4x128xf32>
    %72 = arith.addf %70, %71 : vector<4x128xf32>
    %c0_46 = arith.constant 0 : index
    %c0_47 = arith.constant 0 : index
    %73 = vector.load %arg10[%c0_46, %c0_47] : memref<4x128xf32, #tpu.memory_space<vmem>>, vector<4x128xf32>
    tpu.vector_store %arg10[%c0_46, %c0_47], %72 {strides = array<i32>} : memref<4x128xf32, #tpu.memory_space<vmem>>, vector<4x128xf32>,
    %cst_48 = arith.constant 0.000000e+00 : bf16
    %74 = vector.broadcast %cst_48 : bf16 to vector<4x1xbf16>
    %75 = vector.extract_strided_slice %4 {offsets = [0, 0], sizes = [4, 127], strides = [1, 1]} : vector<4x128xbf16> to vector<4x127xbf16>
    %76 = tpu.concatenate %74, %75 in 1 : vector<4x1xbf16>, vector<4x127xbf16> -> vector<4x128xbf16>
    %cst_49 = arith.constant 0.000000e+00 : bf16
    %77 = vector.shape_cast %37 : vector<1x128xi1> to vector<1x128xi1>
    %78 = vector.broadcast %77 : vector<1x128xi1> to vector<4x128xi1>
    %79 = vector.broadcast %cst_49 : bf16 to vector<4x128xbf16>
    %80 = arith.select %78, %79, %76 : vector<4x128xi1>, vector<4x128xbf16>
    %c1_50 = arith.constant 1 : index
    %c0_51 = arith.constant 0 : index
    %c0_52 = arith.constant 0 : index
    %c0_53 = arith.constant 0 : index
    %81 = vector.load %arg5[%c1_50, %c0_51, %c0_52, %c0_53] : memref<3x3x4x4xbf16, #tpu.memory_space<vmem>>, vector<1x1x4x4xbf16>
    %82 = vector.shape_cast %81 : vector<1x1x4x4xbf16> to vector<4x4xbf16>
    %c0_54 = arith.constant 0 : index
    %c0_55 = arith.constant 0 : index
    %83 = vector.load %arg10[%c0_54, %c0_55] : memref<4x128xf32, #tpu.memory_space<vmem>>, vector<4x128xf32>
    %cst_56 = arith.constant dense<0.000000e+00> : vector<4x128xf32>
    %84 = tpu.matmul %82, %80, %cst_56 {dimension_numbers = #tpu.dot_dimension_numbers<[1], [0], [0], [1], [0, 0, 1, 1], [], []>} : vector<4x4xbf16>, vector<4x128xbf16>, vector<4x128xf32> -> vector<4x128xf32>
    %85 = arith.addf %83, %84 : vector<4x128xf32>
    %c0_57 = arith.constant 0 : index
    %c0_58 = arith.constant 0 : index
    %86 = vector.load %arg10[%c0_57, %c0_58] : memref<4x128xf32, #tpu.memory_space<vmem>>, vector<4x128xf32>
    tpu.vector_store %arg10[%c0_57, %c0_58], %85 {strides = array<i32>} : memref<4x128xf32, #tpu.memory_space<vmem>>, vector<4x128xf32>,
    %c1_59 = arith.constant 1 : index
    %c1_60 = arith.constant 1 : index
    %c0_61 = arith.constant 0 : index
    %c0_62 = arith.constant 0 : index
    %87 = vector.load %arg5[%c1_59, %c1_60, %c0_61, %c0_62] : memref<3x3x4x4xbf16, #tpu.memory_space<vmem>>, vector<1x1x4x4xbf16>
    %88 = vector.shape_cast %87 : vector<1x1x4x4xbf16> to vector<4x4xbf16>
    %c0_63 = arith.constant 0 : index
    %c0_64 = arith.constant 0 : index
    %89 = vector.load %arg10[%c0_63, %c0_64] : memref<4x128xf32, #tpu.memory_space<vmem>>, vector<4x128xf32>
    %cst_65 = arith.constant dense<0.000000e+00> : vector<4x128xf32>
    %90 = tpu.matmul %88, %4, %cst_65 {dimension_numbers = #tpu.dot_dimension_numbers<[1], [0], [0], [1], [0, 0, 1, 1], [], []>} : vector<4x4xbf16>, vector<4x128xbf16>, vector<4x128xf32> -> vector<4x128xf32>
    %91 = arith.addf %89, %90 : vector<4x128xf32>
    %c0_66 = arith.constant 0 : index
    %c0_67 = arith.constant 0 : index
    %92 = vector.load %arg10[%c0_66, %c0_67] : memref<4x128xf32, #tpu.memory_space<vmem>>, vector<4x128xf32>
    tpu.vector_store %arg10[%c0_66, %c0_67], %91 {strides = array<i32>} : memref<4x128xf32, #tpu.memory_space<vmem>>, vector<4x128xf32>,
    %93 = vector.extract_strided_slice %4 {offsets = [0, 1], sizes = [4, 127], strides = [1, 1]} : vector<4x128xbf16> to vector<4x127xbf16>
    %cst_68 = arith.constant 0.000000e+00 : bf16
    %94 = vector.broadcast %cst_68 : bf16 to vector<4x1xbf16>
    %95 = tpu.concatenate %93, %94 in 1 : vector<4x127xbf16>, vector<4x1xbf16> -> vector<4x128xbf16>
    %cst_69 = arith.constant 0.000000e+00 : bf16
    %96 = vector.shape_cast %39 : vector<1x128xi1> to vector<1x128xi1>
    %97 = vector.broadcast %96 : vector<1x128xi1> to vector<4x128xi1>
    %98 = vector.broadcast %cst_69 : bf16 to vector<4x128xbf16>
    %99 = arith.select %97, %98, %95 : vector<4x128xi1>, vector<4x128xbf16>
    %c1_70 = arith.constant 1 : index
    %c2_71 = arith.constant 2 : index
    %c0_72 = arith.constant 0 : index
    %c0_73 = arith.constant 0 : index
    %100 = vector.load %arg5[%c1_70, %c2_71, %c0_72, %c0_73] : memref<3x3x4x4xbf16, #tpu.memory_space<vmem>>, vector<1x1x4x4xbf16>
    %101 = vector.shape_cast %100 : vector<1x1x4x4xbf16> to vector<4x4xbf16>
    %c0_74 = arith.constant 0 : index
    %c0_75 = arith.constant 0 : index
    %102 = vector.load %arg10[%c0_74, %c0_75] : memref<4x128xf32, #tpu.memory_space<vmem>>, vector<4x128xf32>
    %cst_76 = arith.constant dense<0.000000e+00> : vector<4x128xf32>
    %103 = tpu.matmul %101, %99, %cst_76 {dimension_numbers = #tpu.dot_dimension_numbers<[1], [0], [0], [1], [0, 0, 1, 1], [], []>} : vector<4x4xbf16>, vector<4x128xbf16>, vector<4x128xf32> -> vector<4x128xf32>
    %104 = arith.addf %102, %103 : vector<4x128xf32>
    %c0_77 = arith.constant 0 : index
    %c0_78 = arith.constant 0 : index
    %105 = vector.load %arg10[%c0_77, %c0_78] : memref<4x128xf32, #tpu.memory_space<vmem>>, vector<4x128xf32>
    tpu.vector_store %arg10[%c0_77, %c0_78], %104 {strides = array<i32>} : memref<4x128xf32, #tpu.memory_space<vmem>>, vector<4x128xf32>,
    %cst_79 = arith.constant 0.000000e+00 : bf16
    %106 = vector.broadcast %cst_79 : bf16 to vector<4x1xbf16>
    %107 = vector.extract_strided_slice %18 {offsets = [0, 0], sizes = [4, 127], strides = [1, 1]} : vector<4x128xbf16> to vector<4x127xbf16>
    %108 = tpu.concatenate %106, %107 in 1 : vector<4x1xbf16>, vector<4x127xbf16> -> vector<4x128xbf16>
    %cst_80 = arith.constant 0.000000e+00 : bf16
    %109 = vector.shape_cast %37 : vector<1x128xi1> to vector<1x128xi1>
    %110 = vector.broadcast %109 : vector<1x128xi1> to vector<4x128xi1>
    %111 = vector.broadcast %cst_80 : bf16 to vector<4x128xbf16>
    %112 = arith.select %110, %111, %108 : vector<4x128xi1>, vector<4x128xbf16>
    %c2_81 = arith.constant 2 : index
    %c0_82 = arith.constant 0 : index
    %c0_83 = arith.constant 0 : index
    %c0_84 = arith.constant 0 : index
    %113 = vector.load %arg5[%c2_81, %c0_82, %c0_83, %c0_84] : memref<3x3x4x4xbf16, #tpu.memory_space<vmem>>, vector<1x1x4x4xbf16>
    %114 = vector.shape_cast %113 : vector<1x1x4x4xbf16> to vector<4x4xbf16>
    %c0_85 = arith.constant 0 : index
    %c0_86 = arith.constant 0 : index
    %115 = vector.load %arg10[%c0_85, %c0_86] : memref<4x128xf32, #tpu.memory_space<vmem>>, vector<4x128xf32>
    %cst_87 = arith.constant dense<0.000000e+00> : vector<4x128xf32>
    %116 = tpu.matmul %114, %112, %cst_87 {dimension_numbers = #tpu.dot_dimension_numbers<[1], [0], [0], [1], [0, 0, 1, 1], [], []>} : vector<4x4xbf16>, vector<4x128xbf16>, vector<4x128xf32> -> vector<4x128xf32>
    %117 = arith.addf %115, %116 : vector<4x128xf32>
    %c0_88 = arith.constant 0 : index
    %c0_89 = arith.constant 0 : index
    %118 = vector.load %arg10[%c0_88, %c0_89] : memref<4x128xf32, #tpu.memory_space<vmem>>, vector<4x128xf32>
    tpu.vector_store %arg10[%c0_88, %c0_89], %117 {strides = array<i32>} : memref<4x128xf32, #tpu.memory_space<vmem>>, vector<4x128xf32>,
    %c2_90 = arith.constant 2 : index
    %c1_91 = arith.constant 1 : index
    %c0_92 = arith.constant 0 : index
    %c0_93 = arith.constant 0 : index
    %119 = vector.load %arg5[%c2_90, %c1_91, %c0_92, %c0_93] : memref<3x3x4x4xbf16, #tpu.memory_space<vmem>>, vector<1x1x4x4xbf16>
    %120 = vector.shape_cast %119 : vector<1x1x4x4xbf16> to vector<4x4xbf16>
    %c0_94 = arith.constant 0 : index
    %c0_95 = arith.constant 0 : index
    %121 = vector.load %arg10[%c0_94, %c0_95] : memref<4x128xf32, #tpu.memory_space<vmem>>, vector<4x128xf32>
    %cst_96 = arith.constant dense<0.000000e+00> : vector<4x128xf32>
    %122 = tpu.matmul %120, %18, %cst_96 {dimension_numbers = #tpu.dot_dimension_numbers<[1], [0], [0], [1], [0, 0, 1, 1], [], []>} : vector<4x4xbf16>, vector<4x128xbf16>, vector<4x128xf32> -> vector<4x128xf32>
    %123 = arith.addf %121, %122 : vector<4x128xf32>
    %c0_97 = arith.constant 0 : index
    %c0_98 = arith.constant 0 : index
    %124 = vector.load %arg10[%c0_97, %c0_98] : memref<4x128xf32, #tpu.memory_space<vmem>>, vector<4x128xf32>
    tpu.vector_store %arg10[%c0_97, %c0_98], %123 {strides = array<i32>} : memref<4x128xf32, #tpu.memory_space<vmem>>, vector<4x128xf32>,
    %125 = vector.extract_strided_slice %18 {offsets = [0, 1], sizes = [4, 127], strides = [1, 1]} : vector<4x128xbf16> to vector<4x127xbf16>
    %cst_99 = arith.constant 0.000000e+00 : bf16
    %126 = vector.broadcast %cst_99 : bf16 to vector<4x1xbf16>
    %127 = tpu.concatenate %125, %126 in 1 : vector<4x127xbf16>, vector<4x1xbf16> -> vector<4x128xbf16>
    %cst_100 = arith.constant 0.000000e+00 : bf16
    %128 = vector.shape_cast %39 : vector<1x128xi1> to vector<1x128xi1>
    %129 = vector.broadcast %128 : vector<1x128xi1> to vector<4x128xi1>
    %130 = vector.broadcast %cst_100 : bf16 to vector<4x128xbf16>
    %131 = arith.select %129, %130, %127 : vector<4x128xi1>, vector<4x128xbf16>
    %c2_101 = arith.constant 2 : index
    %c2_102 = arith.constant 2 : index
    %c0_103 = arith.constant 0 : index
    %c0_104 = arith.constant 0 : index
    %132 = vector.load %arg5[%c2_101, %c2_102, %c0_103, %c0_104] : memref<3x3x4x4xbf16, #tpu.memory_space<vmem>>, vector<1x1x4x4xbf16>
    %133 = vector.shape_cast %132 : vector<1x1x4x4xbf16> to vector<4x4xbf16>
    %c0_105 = arith.constant 0 : index
    %c0_106 = arith.constant 0 : index
    %134 = vector.load %arg10[%c0_105, %c0_106] : memref<4x128xf32, #tpu.memory_space<vmem>>, vector<4x128xf32>
    %cst_107 = arith.constant dense<0.000000e+00> : vector<4x128xf32>
    %135 = tpu.matmul %133, %131, %cst_107 {dimension_numbers = #tpu.dot_dimension_numbers<[1], [0], [0], [1], [0, 0, 1, 1], [], []>} : vector<4x4xbf16>, vector<4x128xbf16>, vector<4x128xf32> -> vector<4x128xf32>
    %136 = arith.addf %134, %135 : vector<4x128xf32>
    %c0_108 = arith.constant 0 : index
    %c0_109 = arith.constant 0 : index
    %137 = vector.load %arg10[%c0_108, %c0_109] : memref<4x128xf32, #tpu.memory_space<vmem>>, vector<4x128xf32>
    tpu.vector_store %arg10[%c0_108, %c0_109], %136 {strides = array<i32>} : memref<4x128xf32, #tpu.memory_space<vmem>>, vector<4x128xf32>,
    %c0_110 = arith.constant 0 : index
    %c0_111 = arith.constant 0 : index
    %138 = vector.load %arg10[%c0_110, %c0_111] : memref<4x128xf32, #tpu.memory_space<vmem>>, vector<4x128xf32>
    %c0_112 = arith.constant 0 : index
    %c0_113 = arith.constant 0 : index
    %139 = vector.load %arg6[%c0_112, %c0_113] : memref<4x1xf32, #tpu.memory_space<vmem>>, vector<4x1xf32>
    %140 = vector.broadcast %139 : vector<4x1xf32> to vector<4x128xf32>
    %141 = arith.addf %138, %140 : vector<4x128xf32>
    %cst_114 = arith.constant 0.000000e+00 : f32
    %142 = vector.broadcast %cst_114 : f32 to vector<4x128xf32>
    %143 = arith.maximumf %141, %142 : vector<4x128xf32>
    %c0_115 = arith.constant 0 : index
    %c0_116 = arith.constant 0 : index
    %144 = vector.load %arg7[%c0_115, %c0_116] : memref<9x4xbf16, #tpu.memory_space<vmem>>, vector<9x4xbf16>
    %145 = arith.truncf %143 : vector<4x128xf32> to vector<4x128xbf16>
    %cst_117 = arith.constant dense<0.000000e+00> : vector<9x128xf32>
    %146 = tpu.matmul %144, %145, %cst_117 {dimension_numbers = #tpu.dot_dimension_numbers<[1], [0], [0], [1], [0, 0, 1, 1], [], []>} : vector<9x4xbf16>, vector<4x128xbf16>, vector<9x128xf32> -> vector<9x128xf32>
    %c0_118 = arith.constant 0 : index
    %c0_119 = arith.constant 0 : index
    %147 = vector.load %arg8[%c0_118, %c0_119] : memref<9x1xf32, #tpu.memory_space<vmem>>, vector<9x1xf32>
    %148 = vector.broadcast %147 : vector<9x1xf32> to vector<9x128xf32>
    %149 = arith.addf %146, %148 : vector<9x128xf32>
    %c0_120 = arith.constant 0 : index
    %c0_121 = arith.constant 0 : index
    %c0_122 = arith.constant 0 : index
    %150 = vector.load %arg9[%c0_120, %c0_121, %c0_122] : memref<1x9x128xf32, #tpu.memory_space<vmem>>, vector<1x9x128xf32>
    %151 = vector.shape_cast %150 : vector<1x9x128xf32> to vector<9x128xf32>
    %152 = vector.shape_cast %149 : vector<9x128xf32> to vector<1x9x128xf32>
    tpu.vector_store %arg9[%c0_120, %c0_121, %c0_122], %152 {strides = array<i32>} : memref<1x9x128xf32, #tpu.memory_space<vmem>>, vector<1x9x128xf32>,
    return
  }
  func.func @transform_0(%arg0: i32, %arg1: i32) -> (i32, i32, i32) {
    %c0_i32 = arith.constant 0 : i32
    %c0_i32_0 = arith.constant 0 : i32
    return %arg0, %c0_i32, %arg1 : i32, i32, i32
  }
  func.func @transform_1(%arg0: i32, %arg1: i32) -> (i32, i32, i32, i32) {
    %c1_i32 = arith.constant 1 : i32
    %0 = arith.muli %arg1, %c1_i32 : i32
    %c1_i32_0 = arith.constant 1 : i32
    %1 = arith.subi %0, %c1_i32_0 : i32
    %c0_i32 = arith.constant 0 : i32
    %2 = arith.maxsi %1, %c0_i32 : i32
    %c0_i32_1 = arith.constant 0 : i32
    %c0_i32_2 = arith.constant 0 : i32
    %c0_i32_3 = arith.constant 0 : i32
    return %arg0, %c0_i32_1, %2, %c0_i32_2 : i32, i32, i32, i32
  }
  func.func @transform_2(%arg0: i32, %arg1: i32) -> (i32, i32, i32, i32) {
    %c1_i32 = arith.constant 1 : i32
    %0 = arith.addi %arg1, %c1_i32 : i32
    %c1_i32_0 = arith.constant 1 : i32
    %1 = arith.muli %0, %c1_i32_0 : i32
    %c1_i32_1 = arith.constant 1 : i32
    %2 = arith.minsi %1, %c1_i32_1 : i32
    %c0_i32 = arith.constant 0 : i32
    %c0_i32_2 = arith.constant 0 : i32
    %c0_i32_3 = arith.constant 0 : i32
    return %arg0, %c0_i32, %2, %c0_i32_2 : i32, i32, i32, i32
  }
  func.func @transform_3(%arg0: i32, %arg1: i32) -> (i32, i32, i32, i32) {
    %c0_i32 = arith.constant 0 : i32
    %c0_i32_0 = arith.constant 0 : i32
    %c0_i32_1 = arith.constant 0 : i32
    %c0_i32_2 = arith.constant 0 : i32
    %c0_i32_3 = arith.constant 0 : i32
    return %c0_i32, %c0_i32_0, %c0_i32_1, %c0_i32_2 : i32, i32, i32, i32
  }
  func.func @transform_4(%arg0: i32, %arg1: i32) -> (i32, i32) {
    %c0_i32 = arith.constant 0 : i32
    %c0_i32_0 = arith.constant 0 : i32
    %c0_i32_1 = arith.constant 0 : i32
    return %c0_i32, %c0_i32_0 : i32, i32
  }
  func.func @transform_5(%arg0: i32, %arg1: i32) -> (i32, i32) {
    %c0_i32 = arith.constant 0 : i32
    %c0_i32_0 = arith.constant 0 : i32
    %c0_i32_1 = arith.constant 0 : i32
    return %c0_i32, %c0_i32_0 : i32, i32
  }
  func.func @transform_6(%arg0: i32, %arg1: i32) -> (i32, i32) {
    %c0_i32 = arith.constant 0 : i32
    %c0_i32_0 = arith.constant 0 : i32
    %c0_i32_1 = arith.constant 0 : i32
    return %c0_i32, %c0_i32_0 : i32, i32
  }
  func.func @transform_7(%arg0: i32, %arg1: i32) -> (i32, i32, i32) {
    %c0_i32 = arith.constant 0 : i32
    %c0_i32_0 = arith.constant 0 : i32
    return %arg0, %c0_i32, %arg1 : i32, i32, i32
  }
}

</mosaic_0001>

<llo_original>
// kernel: tpu_custom_call.1
$region0: #{tpu_custom_call.1}
  #allocation0 [shape = 'u32[]', space=smem, size = 0x4, offset = 0x4, fixed_abs, tag = 'smem constant byte address 0x4 - core index']
  #allocation1 [shape = 'u32[144,128]{1,0:T(1,128)}', space=vmem, size = 0x12000, scoped, tag = 'internal scratch']
  #allocation2 [shape = 'f32[4,128]{1,0:T(4,128)}', space=vmem, size = 0x800, scoped, tag = 'scratch operand']
  %s0 = inlined_call_operand.vmem [shape: f32[2,4,256], index: 0, kind: input, shape index: {}]
  %s1 = inlined_call_operand.hbm [shape: f32[2,4,16,16], index: 1, kind: input, shape index: {}]
  %s2 = inlined_call_operand.hbm [shape: f32[2,4,16,16], index: 2, kind: input, shape index: {}]
  %s3 = inlined_call_operand.vmem [shape: bf16[3,3,4,4], index: 3, kind: input, shape index: {}]
  %s4 = inlined_call_operand.vmem [shape: f32[4,1], index: 4, kind: input, shape index: {}]
  %s5 = inlined_call_operand.vmem [shape: bf16[9,4], index: 5, kind: input, shape index: {}]
  %s6 = inlined_call_operand.vmem [shape: f32[9,1], index: 6, kind: input, shape index: {}]
  %s7 = inlined_call_operand.vmem [shape: f32[2,9,256], index: 7, kind: output, shape index: {}]
  %s8 = sld [smem:[#allocation0]]
  $region103: #{tpu_custom_call.1} parent=0
    _
  %s10 = ssub.s32 1, %s8
  %s11 = scalar_select 0, %s10, %s8
  $region1: #{tpu_custom_call.1} parent=0
    #allocation3 [shape = 'u8[32768]{0}', space=vmem, size = 0x8000, scoped, tag = 'input window, operand 1']
    #allocation4 [shape = 's32[2]{0}', space=sflag, size = 0x8, scoped, tag = 'scoped memory for tpu_custom_call.1']
    #allocation5 [shape = 'u8[32768]{0}', space=vmem, size = 0x8000, scoped, tag = 'input window, operand 2']
    #allocation6 [shape = 's32[2]{0}', space=sflag, size = 0x8, scoped, tag = 'scoped memory for tpu_custom_call.1']
    #allocation7 [shape = 'u8[16384]{0}', space=vmem, size = 0x4000, scoped, tag = 'output window, operand 0']
    %12 = vsyncpa [#allocation4], 0
    %s13 = scalar_lea.sflag [#allocation4], 1
    %14 = vsyncpa %s13, 0
    %15 = vsyncpa [#allocation6], 0
    %s16 = scalar_lea.sflag [#allocation6], 1
    %17 = vsyncpa %s16, 0
    loop: start=0, step=1, limit=6
    $region2: #{tpu_custom_call.1} parent=1 // loop_pre_header
      _
    $region3: #{tpu_custom_call.1} parent=1 // loop_header
      %s19 = sphi 0, %s23
      %p20 = scmp.ge.s32.totalorder %s19, 6
      %s26 = sphi 0, %s38
      %s27 = sphi 0, %s34
      %s28 = sphi 0, %s26
      %s29 = sphi 0, %s27
      %s30 = sphi 0, %s28
      %s31 = sphi 0, %s29
      %s43 = sphi 0, %s45
      %s46 = sphi 0, %s43
      %s47 = sphi 0, %s46
      %s63 = sphi 0, %s47
      %s77 = sphi 0, %s79
      %s80 = sphi 0, %s77
      %s81 = sphi 0, %s80
      %s97 = sphi 0, %s81
      %s111 = sphi 0, %s113
      %s114 = sphi 0, %s111
      %s115 = sphi 0, %s114
      %s131 = sphi 0, %s115
      %s135 = sphi 0, %s135
      %s137 = sphi 0, %s135
      %s138 = sphi 0, %s137
      %s152 = sphi 0, %s138
      %s156 = sphi 0, %s156
      %s158 = sphi 0, %s156
      %s159 = sphi 0, %s158
      %s173 = sphi 0, %s159
      %s177 = sphi 0, %s177
      %s179 = sphi 0, %s177
      %s180 = sphi 0, %s179
      %s194 = sphi 0, %s180
      %s198 = sphi 0, %s198
      %s200 = sphi 0, %s198
      %s201 = sphi 0, %s200
      %s215 = sphi 0, %s201
      %s223 = sphi 0, %s225
      %s226 = sphi 0, %s223
      %s227 = sphi 0, %s226
      %s243 = sphi 0, %s227
    $region4: #{tpu_custom_call.1} parent=1 // loop_header_branch
      %22 = sbr.rel (%p20) target = $region8
    $region5: #{tpu_custom_call.1} parent=1 // loop_body
      %s24 = ssub.s32 %s19, 1
      %s25 = ssub.s32 %s19, 2
      %s32 = sadd.s32 1, %s27
      %p33 = scmp.ge.s32.totalorder %s32, 2
      %s34 = scalar_select %p33, 0, %s32
      %s35 = sadd.s32 1, %s26
      %s36 = scalar_select %p33, %s35, %s26
      %p37 = scmp.ge.s32.totalorder %s36, 2
      %s38 = scalar_select %p37, 0, %s36
      %s39 = ssub.s32 %s26, %s38
      %s40 = ssub.s32 %s27, %s34
      %s41 = sor.u32 %s39, %s40
      %p42 = scmp.eq.s32.totalorder %s41, 0
      %s44 = sadd.s32 %s43, 1
      %s45 = scalar_select %p42, %s43, %s44
      %p48 = pneg %p42
      %p49 = scmp.eq.s32.totalorder %s19, 3
      %p50 = por %p48, %p49
      %p51 = scmp.ne.s32.totalorder %s43, %s46
      %p52 = scmp.eq.s32.totalorder %s19, 0
      %p53 = por %p51, %p52
      %p54 = scmp.ne.s32.totalorder %s43, %s46
      %p55 = scmp.eq.s32.totalorder %s24, 3
      %p56 = por %p54, %p55
      %p57 = scmp.ne.s32.totalorder %s46, %s47
      %p58 = scmp.eq.s32.totalorder %s24, 0
      %p59 = por %p57, %p58
      %p60 = scmp.ne.s32.totalorder %s46, %s47
      %p61 = scmp.eq.s32.totalorder %s25, 3
      %p62 = por %p60, %p61
      %p64 = scmp.ne.s32.totalorder %s47, %s63
      %p65 = scmp.eq.s32.totalorder %s25, 0
      %p66 = por %p64, %p65
      %s67 = ssub.s32 %s27, 1
      %p68 = scmp.gt.s32.totalorder %s67, 0
      %s69 = scalar_select %p68, %s67, 0
      %s70 = ssub.s32 %s34, 1
      %p71 = scmp.gt.s32.totalorder %s70, 0
      %s72 = scalar_select %p71, %s70, 0
      %s73 = ssub.s32 %s26, %s38
      %s74 = ssub.s32 %s69, %s72
      %s75 = sor.u32 %s73, %s74
      %p76 = scmp.eq.s32.totalorder %s75, 0
      %s78 = sadd.s32 %s77, 1
      %s79 = scalar_select %p76, %s77, %s78
      %p82 = pneg %p76
      %p83 = scmp.eq.s32.totalorder %s19, 3
      %p84 = por %p82, %p83
      %p85 = scmp.ne.s32.totalorder %s77, %s80
      %p86 = scmp.eq.s32.totalorder %s19, 0
      %p87 = por %p85, %p86
      %p88 = scmp.ne.s32.totalorder %s77, %s80
      %p89 = scmp.eq.s32.totalorder %s24, 3
      %p90 = por %p88, %p89
      %p91 = scmp.ne.s32.totalorder %s80, %s81
      %p92 = scmp.eq.s32.totalorder %s24, 0
      %p93 = por %p91, %p92
      %p94 = scmp.ne.s32.totalorder %s80, %s81
      %p95 = scmp.eq.s32.totalorder %s25, 3
      %p96 = por %p94, %p95
      %p98 = scmp.ne.s32.totalorder %s81, %s97
      %p99 = scmp.eq.s32.totalorder %s25, 0
      %p100 = por %p98, %p99
      %s101 = sadd.s32 %s27, 1
      %p102 = scmp.lt.s32.totalorder %s101, 1
      %s103 = scalar_select %p102, %s101, 1
      %s104 = sadd.s32 %s34, 1
      %p105 = scmp.lt.s32.totalorder %s104, 1
      %s106 = scalar_select %p105, %s104, 1
      %s107 = ssub.s32 %s26, %s38
      %s108 = ssub.s32 %s103, %s106
      %s109 = sor.u32 %s107, %s108
      %p110 = scmp.eq.s32.totalorder %s109, 0
      %s112 = sadd.s32 %s111, 1
      %s113 = scalar_select %p110, %s111, %s112
      %p116 = pneg %p110
      %p117 = scmp.eq.s32.totalorder %s19, 3
      %p118 = por %p116, %p117
      %p119 = scmp.ne.s32.totalorder %s111, %s114
      %p120 = scmp.eq.s32.totalorder %s19, 0
      %p121 = por %p119, %p120
      %p122 = scmp.ne.s32.totalorder %s111, %s114
      %p123 = scmp.eq.s32.totalorder %s24, 3
      %p124 = por %p122, %p123
      %p125 = scmp.ne.s32.totalorder %s114, %s115
      %p126 = scmp.eq.s32.totalorder %s24, 0
      %p127 = por %p125, %p126
      %p128 = scmp.ne.s32.totalorder %s114, %s115
      %p129 = scmp.eq.s32.totalorder %s25, 3
      %p130 = por %p128, %p129
      %p132 = scmp.ne.s32.totalorder %s115, %s131
      %p133 = scmp.eq.s32.totalorder %s25, 0
      %p134 = por %p132, %p133
      %s136 = sadd.s32 %s135, 1
      %p139 = scmp.eq.s32.totalorder %s19, 3
      %p140 = scmp.ne.s32.totalorder %s135, %s137
      %p141 = scmp.eq.s32.totalorder %s19, 0
      %p142 = por %p140, %p141
      %p143 = scmp.ne.s32.totalorder %s135, %s137
      %p144 = scmp.eq.s32.totalorder %s24, 3
      %p145 = por %p143, %p144
      %p146 = scmp.ne.s32.totalorder %s137, %s138
      %p147 = scmp.eq.s32.totalorder %s24, 0
      %p148 = por %p146, %p147
      %p149 = scmp.ne.s32.totalorder %s137, %s138
      %p150 = scmp.eq.s32.totalorder %s25, 3
      %p151 = por %p149, %p150
      %p153 = scmp.ne.s32.totalorder %s138, %s152
      %p154 = scmp.eq.s32.totalorder %s25, 0
      %p155 = por %p153, %p154
      %s157 = sadd.s32 %s156, 1
      %p160 = scmp.eq.s32.totalorder %s19, 3
      %p161 = scmp.ne.s32.totalorder %s156, %s158
      %p162 = scmp.eq.s32.totalorder %s19, 0
      %p163 = por %p161, %p162
      %p164 = scmp.ne.s32.totalorder %s156, %s158
      %p165 = scmp.eq.s32.totalorder %s24, 3
      %p166 = por %p164, %p165
      %p167 = scmp.ne.s32.totalorder %s158, %s159
      %p168 = scmp.eq.s32.totalorder %s24, 0
      %p169 = por %p167, %p168
      %p170 = scmp.ne.s32.totalorder %s158, %s159
      %p171 = scmp.eq.s32.totalorder %s25, 3
      %p172 = por %p170, %p171
      %p174 = scmp.ne.s32.totalorder %s159, %s173
      %p175 = scmp.eq.s32.totalorder %s25, 0
      %p176 = por %p174, %p175
      %s178 = sadd.s32 %s177, 1
      %p181 = scmp.eq.s32.totalorder %s19, 3
      %p182 = scmp.ne.s32.totalorder %s177, %s179
      %p183 = scmp.eq.s32.totalorder %s19, 0
      %p184 = por %p182, %p183
      %p185 = scmp.ne.s32.totalorder %s177, %s179
      %p186 = scmp.eq.s32.totalorder %s24, 3
      %p187 = por %p185, %p186
      %p188 = scmp.ne.s32.totalorder %s179, %s180
      %p189 = scmp.eq.s32.totalorder %s24, 0
      %p190 = por %p188, %p189
      %p191 = scmp.ne.s32.totalorder %s179, %s180
      %p192 = scmp.eq.s32.totalorder %s25, 3
      %p193 = por %p191, %p192
      %p195 = scmp.ne.s32.totalorder %s180, %s194
      %p196 = scmp.eq.s32.totalorder %s25, 0
      %p197 = por %p195, %p196
      %s199 = sadd.s32 %s198, 1
      %p202 = scmp.eq.s32.totalorder %s19, 3
      %p203 = scmp.ne.s32.totalorder %s198, %s200
      %p204 = scmp.eq.s32.totalorder %s19, 0
      %p205 = por %p203, %p204
      %p206 = scmp.ne.s32.totalorder %s198, %s200
      %p207 = scmp.eq.s32.totalorder %s24, 3
      %p208 = por %p206, %p207
      %p209 = scmp.ne.s32.totalorder %s200, %s201
      %p210 = scmp.eq.s32.totalorder %s24, 0
      %p211 = por %p209, %p210
      %p212 = scmp.ne.s32.totalorder %s200, %s201
      %p213 = scmp.eq.s32.totalorder %s25, 3
      %p214 = por %p212, %p213
      %p216 = scmp.ne.s32.totalorder %s201, %s215
      %p217 = scmp.eq.s32.totalorder %s25, 0
      %p218 = por %p216, %p217
      %s219 = ssub.s32 %s26, %s38
      %s220 = ssub.s32 %s27, %s34
      %s221 = sor.u32 %s219, %s220
      %p222 = scmp.eq.s32.totalorder %s221, 0
      %s224 = sadd.s32 %s223, 1
      %s225 = scalar_select %p222, %s223, %s224
      %p228 = pneg %p222
      %p229 = scmp.eq.s32.totalorder %s19, 3
      %p230 = por %p228, %p229
      %p231 = scmp.ne.s32.totalorder %s223, %s226
      %p232 = scmp.eq.s32.totalorder %s19, 0
      %p233 = por %p231, %p232
      %p234 = scmp.ne.s32.totalorder %s223, %s226
      %p235 = scmp.eq.s32.totalorder %s24, 3
      %p236 = por %p234, %p235
      %p237 = scmp.ne.s32.totalorder %s226, %s227
      %p238 = scmp.eq.s32.totalorder %s24, 0
      %p239 = por %p237, %p238
      %p240 = scmp.ne.s32.totalorder %s226, %s227
      %p241 = scmp.eq.s32.totalorder %s25, 3
      %p242 = por %p240, %p241
      %p244 = scmp.ne.s32.totalorder %s227, %s243
      %p245 = scmp.eq.s32.totalorder %s25, 0
      %p246 = por %p244, %p245
      %p247 = scmp.le.s32.totalorder 1, %s19
      %p248 = scmp.lt.s32.totalorder %s19, 5
      %p249 = pnand %p247, %p248
      %p250 = pneg %p249
      // Predicated region
      $region9: #{tpu_custom_call.1} parent=5 // pred_check
        _
      $region10: #{tpu_custom_call.1} parent=5 // pred_check_branch
        %252 = sbr.rel (%p249) target = $region12
      $region11: #{tpu_custom_call.1} parent=5 // pred_region
        %s253 = ssub.s32 %s19, 1
        // Predicated region
        $region13: #{tpu_custom_call.1} parent=11 // pred_check
          %p254 = pneg %p148
        $region14: #{tpu_custom_call.1} parent=11 // pred_check_branch
          %256 = sbr.rel (%p254) target = $region16
        $region15: #{tpu_custom_call.1} parent=11 // pred_region
          _
        $region16: #{tpu_custom_call.1} parent=11 // pred_fallthru
          _
        // Predicated region
        $region17: #{tpu_custom_call.1} parent=11 // pred_check
          %p257 = pneg %p169
        $region18: #{tpu_custom_call.1} parent=11 // pred_check_branch
          %259 = sbr.rel (%p257) target = $region20
        $region19: #{tpu_custom_call.1} parent=11 // pred_region
          _
        $region20: #{tpu_custom_call.1} parent=11 // pred_fallthru
          _
        // Predicated region
        $region21: #{tpu_custom_call.1} parent=11 // pred_check
          %p260 = pneg %p190
        $region22: #{tpu_custom_call.1} parent=11 // pred_check_branch
          %262 = sbr.rel (%p260) target = $region24
        $region23: #{tpu_custom_call.1} parent=11 // pred_region
          _
        $region24: #{tpu_custom_call.1} parent=11 // pred_fallthru
          _
        // Predicated region
        $region25: #{tpu_custom_call.1} parent=11 // pred_check
          %p263 = pneg %p211
        $region26: #{tpu_custom_call.1} parent=11 // pred_check_branch
          %265 = sbr.rel (%p263) target = $region28
        $region27: #{tpu_custom_call.1} parent=11 // pred_region
          _
        $region28: #{tpu_custom_call.1} parent=11 // pred_fallthru
          _
      $region12: #{tpu_custom_call.1} parent=5 // pred_fallthru
        _
      %p266 = scmp.lt.s32.totalorder %s19, 4
      // Predicated region
      $region29: #{tpu_custom_call.1} parent=5 // pred_check
        %p267 = pneg %p266
      $region30: #{tpu_custom_call.1} parent=5 // pred_check_branch
        %269 = sbr.rel (%p267) target = $region32
      $region31: #{tpu_custom_call.1} parent=5 // pred_region
        // Predicated region
        $region33: #{tpu_custom_call.1} parent=31 // pred_check
          %p270 = pneg %p53
        $region34: #{tpu_custom_call.1} parent=31 // pred_check_branch
          %272 = sbr.rel (%p270) target = $region36
        $region35: #{tpu_custom_call.1} parent=31 // pred_region
          %p273 = scmp.lt.s32.totalorder %s26, 1
          %s274 = scalar_select %p273, %s26, 1
          %p275 = scmp.lt.s32.totalorder %s27, 1
          %s276 = scalar_select %p275, %s27, 1
          %s277 = smul.addr %s274, 2
          %s278 = sadd.s32 %s276, %s277
          %s279 = smul.addr %s278, 4
          %s280 = scalar_lea.vmem %s0, %s279
        $region36: #{tpu_custom_call.1} parent=31 // pred_fallthru
          _
        // Predicated region
        $region37: #{tpu_custom_call.1} parent=31 // pred_check
          %p281 = pneg %p87
        $region38: #{tpu_custom_call.1} parent=31 // pred_check_branch
          %283 = sbr.rel (%p281) target = $region40
        $region39: #{tpu_custom_call.1} parent=31 // pred_region
          %s284 = sand.u32 %s77, 1
          %s285 = scalar_lea.sflag [#allocation4], %s284
          %s286 = sand.u32 %s77, 1
          %s287 = smul.addr %s286, 32
          %s288 = scalar_lea.vmem [#allocation3], %s287
          %s289 = ssub.s32 %s27, 1
          %p290 = scmp.gt.s32.totalorder %s289, 0
          %s291 = scalar_select %p290, %s289, 0
          %s293 = ssub.s32 512, 512
          %294 = vsyncadd %s285, %s293
          %s295 = smul.addr %s26, 8
          %s296 = sadd.s32 %s291, %s295
          %s297 = smul.addr %s296, 128
          %s298 = scalar_lea.hbm %s1, %s297
          %s299 = sshll.u32 %s288, 4
          %s300 = int_to_ptr.vmem [resolvable:$true] %s299
          %305 = dma.hbm_to_vmem [thread:$0]  %s298, 512, %s300, %s285, 256, 128, 8
        $region40: #{tpu_custom_call.1} parent=31 // pred_fallthru
          _
        // Predicated region
        $region41: #{tpu_custom_call.1} parent=31 // pred_check
          %p306 = pneg %p121
        $region42: #{tpu_custom_call.1} parent=31 // pred_check_branch
          %308 = sbr.rel (%p306) target = $region44
        $region43: #{tpu_custom_call.1} parent=31 // pred_region
          %s309 = sand.u32 %s111, 1
          %s310 = scalar_lea.sflag [#allocation6], %s309
          %s311 = sand.u32 %s111, 1
          %s312 = smul.addr %s311, 32
          %s313 = scalar_lea.vmem [#allocation5], %s312
          %s314 = sadd.s32 %s27, 1
          %p315 = scmp.lt.s32.totalorder %s314, 1
          %s316 = scalar_select %p315, %s314, 1
          %s318 = ssub.s32 512, 512
          %319 = vsyncadd %s310, %s318
          %s320 = smul.addr %s26, 8
          %s321 = sadd.s32 %s316, %s320
          %s322 = smul.addr %s321, 128
          %s323 = scalar_lea.hbm %s2, %s322
          %s324 = sshll.u32 %s313, 4
          %s325 = int_to_ptr.vmem [resolvable:$true] %s324
          %330 = dma.hbm_to_vmem [thread:$0]  %s323, 512, %s325, %s310, 256, 128, 8
        $region44: #{tpu_custom_call.1} parent=31 // pred_fallthru
          _
      $region32: #{tpu_custom_call.1} parent=5 // pred_fallthru
        _
      %p331 = scmp.le.s32.totalorder 1, %s19
      %p332 = scmp.lt.s32.totalorder %s19, 5
      %p333 = pnand %p331, %p332
      %p334 = pneg %p333
      // Predicated region
      $region45: #{tpu_custom_call.1} parent=5 // pred_check
        _
      $region46: #{tpu_custom_call.1} parent=5 // pred_check_branch
        %336 = sbr.rel (%p333) target = $region48
      $region47: #{tpu_custom_call.1} parent=5 // pred_region
        %s337 = ssub.s32 %s19, 1
        %s338 = sand.u32 %s80, 1
        %s339 = scalar_lea.sflag [#allocation4], %s338
        %s340 = sand.u32 %s80, 1
        %s341 = smul.addr %s340, 32
        %s342 = scalar_lea.vmem [#allocation3], %s341
        // Predicated region
        $region49: #{tpu_custom_call.1} parent=47 // pred_check
          %p343 = pneg %p93
        $region50: #{tpu_custom_call.1} parent=47 // pred_check_branch
          %345 = sbr.rel (%p343) target = $region52
        $region51: #{tpu_custom_call.1} parent=47 // pred_region
          %346 = dma.done %s339, 512
        $region52: #{tpu_custom_call.1} parent=47 // pred_fallthru
          _
        %s347 = sand.u32 %s114, 1
        %s348 = scalar_lea.sflag [#allocation6], %s347
        %s349 = sand.u32 %s114, 1
        %s350 = smul.addr %s349, 32
        %s351 = scalar_lea.vmem [#allocation5], %s350
        // Predicated region
        $region53: #{tpu_custom_call.1} parent=47 // pred_check
          %p352 = pneg %p127
        $region54: #{tpu_custom_call.1} parent=47 // pred_check_branch
          %354 = sbr.rel (%p352) target = $region56
        $region55: #{tpu_custom_call.1} parent=47 // pred_region
          %355 = dma.done %s348, 512
        $region56: #{tpu_custom_call.1} parent=47 // pred_fallthru
          _
        %p356 = scmp.lt.s32.totalorder %s28, 1
        %s357 = scalar_select %p356, %s28, 1
        %p358 = scmp.lt.s32.totalorder %s29, 1
        %s359 = scalar_select %p358, %s29, 1
        %s360 = smul.addr %s357, 2
        %s361 = sadd.s32 %s359, %s360
        %s362 = smul.addr %s361, 4
        %s363 = scalar_lea.vmem %s0, %s362
        %p364 = pneg %p59
        %p365 = pneg %p56
        %s366 = sand.u32 %s80, 1
        %s367 = scalar_lea.sflag [#allocation4], %s366
        %s368 = sand.u32 %s80, 1
        %s369 = smul.addr %s368, 32
        %s370 = scalar_lea.vmem [#allocation3], %s369
        %p371 = pneg %p93
        %p372 = pneg %p90
        %s373 = sand.u32 %s114, 1
        %s374 = scalar_lea.sflag [#allocation6], %s373
        %s375 = sand.u32 %s114, 1
        %s376 = smul.addr %s375, 32
        %s377 = scalar_lea.vmem [#allocation5], %s376
        %p378 = pneg %p127
        %p379 = pneg %p124
        %p380 = pneg %p148
        %p381 = pneg %p145
        %p382 = pneg %p169
        %p383 = pneg %p166
        %p384 = pneg %p190
        %p385 = pneg %p187
        %p386 = pneg %p211
        %p387 = pneg %p208
        %p388 = pneg %p239
        %p389 = pneg %p236
        %s390 = sand.u32 %s226, 1
        %s391 = sand.u32 %s226, 1
        %s392 = smul.addr %s391, 16
        %s393 = scalar_lea.vmem [#allocation7], %s392
        %p394 = scmp.lt.s32.totalorder %s28, 1
        %s395 = scalar_select %p394, %s28, 1
        %p396 = scmp.lt.s32.totalorder %s29, 1
        %s397 = scalar_select %p396, %s29, 1
        %s398 = smul.addr %s395, 2
        %s399 = sadd.s32 %s397, %s398
        %s400 = smul.addr %s399, 4
        %s401 = scalar_lea.vmem %s0, %s400
        %s402 = ssub.s32 %s29, 1
        %p403 = scmp.gt.s32.totalorder %s402, 0
        %s404 = scalar_select %p403, %s402, 0
        %s405 = sadd.s32 %s29, 1
        %p406 = scmp.lt.s32.totalorder %s405, 1
        %s407 = scalar_select %p406, %s405, 1
        %p409 = scmp.eq.s32.totalorder %s29, 0
        %p410 = scmp.eq.s32.totalorder %s29, 1
        %v411 = vld [vmem:[%s401] sm:$0xf]
        %v412 = vpack.c.bf16 %v411, %v411
        %v413 = vld [vmem:[%s342 + $0x7] sm:$0x1]
        %v414 = vld [vmem:[%s342 + $0xf] sm:$0x1]
        %v415 = vld [vmem:[%s342 + $0x17] sm:$0x1]
        %v416 = vld [vmem:[%s342 + $0x1f] sm:$0x1]
        %v417 = vpack.c.bf16 %v413, %v413
        %v418 = vpack.c.bf16 %v414, %v414
        %v419 = vpack.c.bf16 %v415, %v415
        %v420 = vpack.c.bf16 %v416, %v416
        %v421 = vld [vmem:[%s351] sm:$0x1]
        %v422 = vld [vmem:[%s351 + $0x8] sm:$0x1]
        %v423 = vld [vmem:[%s351 + $0x10] sm:$0x1]
        %v424 = vld [vmem:[%s351 + $0x18] sm:$0x1]
        %v425 = vpack.c.bf16 %v421, %v421
        %v426 = vpack.c.bf16 %v422, %v422
        %v427 = vpack.c.bf16 %v423, %v423
        %v428 = vpack.c.bf16 %v424, %v424
        %s429 = scalar_select %p409, 1, 0
        %v430 = vstv %s429
        %vm431 = vcmp.eq.s32.totalorder %v430, 1
        %v432 = vsel %vm431, 0, %v417
        %v433 = vsel %vm431, 0, %v418
        %v434 = vsel %vm431, 0, %v419
        %v435 = vsel %vm431, 0, %v420
        %s436 = scalar_select %p410, 1, 0
        %v437 = vstv %s436
        %vm438 = vcmp.eq.s32.totalorder %v437, 1
        %v439 = vsel %vm438, 0, %v425
        %v440 = vsel %vm438, 0, %v426
        %v441 = vsel %vm438, 0, %v427
        %v442 = vsel %vm438, 0, %v428
        %v447 = vunpack.c.l.b16 %v432
        %v448 = vunpack.c.l.b16 %v433
        %v449 = vunpack.c.l.b16 %v434
        %v450 = vunpack.c.l.b16 %v435
        %v451 = vrot.slane %v448, 7
        %vm452 = vcmask 1041409
        %v453 = vsel %vm452, %v451, %v447
        %v454 = vrot.slane %v449, 6
        %vm455 = vcmask 1042434
        %v456 = vsel %vm455, %v454, %v453
        %v457 = vrot.slane %v450, 5
        %vm458 = vcmask 1043459
        %v459 = vsel %vm458, %v457, %v456
        %v460 = vpack.c.b16 %v459, %v459
        %462 = vrot.lane.b32.xlu0 %v412, 16
        %v463 = vpop.permute.xlu0 %462
        %vm464 = vcmask 130048
        %v467 = vsel %vm464, %v460, %v463
        %468 = vrot.lane.b32.xlu0 %v412, 112
        %v469 = vpop.permute.xlu0 %468
        %v474 = vunpack.c.l.b16 %v439
        %v475 = vunpack.c.l.b16 %v440
        %v476 = vunpack.c.l.b16 %v441
        %v477 = vunpack.c.l.b16 %v442
        %v478 = vrot.slane %v475, 7
        %v479 = vsel %vm452, %v478, %v474
        %v480 = vrot.slane %v476, 6
        %v481 = vsel %vm455, %v480, %v479
        %v482 = vrot.slane %v477, 5
        %v483 = vsel %vm458, %v482, %v481
        %v484 = vpack.c.b16 %v483, %v483
        %485 = vrot.lane.b32.xlu0 %v484, 112
        %v486 = vpop.permute.xlu0 %485
        %vm487 = vcmask 916480
        %v490 = vsel %vm487, %v469, %v486
        %v491 = vlaneseq
        %v492 = vand.u32 %v491, 127
        %vm493 = vcmp.lt.s32.totalorder %v492, 0
        %v494 = vsub.s32 0, %v492
        %v495 = vsel %vm493, %v494, %v492
        %v496 = vshrl.u32 %v495, 4
        %v497 = vand.u32 %v495, 15
        %v498 = vsub.s32 0, %v497
        %v499 = vsel %vm493, %v498, %v497
        %vm500 = vcmp.ne.s32.totalorder %v499, 0
        %vm501 = vcmp.lt.s32.totalorder %v499, 0
        %vm502 = vmand %vm501, %vm500
        %v503 = vadd.s32 %v499, 16
        %v504 = vsel %vm502, %v503, %v499
        %vm505 = vcmp.eq.s32.totalorder %v504, 0
        %vm506 = vcmp.eq.s32.totalorder %v504, 15
        %507 = vst [vmem:[#allocation2] sm:$0xf] 0.0
        %509 = vrot.lane.b32.xlu0 %v467, 1
        %v510 = vpop.permute.xlu0 %509
        %vm511 = vcmask 7168
        %v514 = vsel %vm511, 0, %v510
        %v516 = vsel %vm505, 1, 0
        %vm517 = vcmp.eq.s32.totalorder %v516, 1
        %vm518 = vmpackc.low %vm517, %vm517
        %v519 = vsel %vm518, 0, %v514
        %v520 = vld [vmem:[%s3] sm:$0x3]
        %v521 = vld [vmem:[#allocation2] sm:$0xf]
        %vm522 = vcmask 31744
        %v524 = vsel %vm522, %v520, 0
        %vm526 = vcmask 1041408
        %v528 = vsel %vm526, %v519, 0
        %530 = vmatprep.subr.bf16.mxu0 0
        %531 = vmatpush1.bf16.msra.mxu0 %v528
        %532 = vmatprep.subr.bf16.mxu0 0
        %533 = vmatpush1.bf16.msra.mxu0 0
        %534 = vmatprep.subr.bf16.mxu0 0
        %535 = vmatpush1.bf16.msra.mxu0 0
        %536 = vmatprep.subr.bf16.mxu0 0
        %537 = vmatpush1.bf16.msra.mxu0 0
        %538 = vmatprep.subr.bf16.mxu0 0
        %539 = vmatpush1.bf16.msra.mxu0 0
        %540 = vmatprep.subr.bf16.mxu0 0
        %541 = vmatpush1.bf16.msra.mxu0 0
        %542 = vmatprep.subr.bf16.mxu0 0
        %543 = vmatpush1.bf16.msra.mxu0 0
        %544 = vmatprep.subr.bf16.mxu0 0
        %545 = vmatpush1.bf16.msra.mxu0 0
        %546 = vmatprep.subr.bf16.mxu0 0
        %547 = vmatpush1.bf16.msra.mxu0 0
        %548 = vmatprep.subr.bf16.mxu0 0
        %549 = vmatpush1.bf16.msra.mxu0 0
        %550 = vmatprep.subr.bf16.mxu0 0
        %551 = vmatpush1.bf16.msra.mxu0 0
        %552 = vmatprep.subr.bf16.mxu0 0
        %553 = vmatpush1.bf16.msra.mxu0 0
        %554 = vmatprep.subr.bf16.mxu0 0
        %555 = vmatpush1.bf16.msra.mxu0 0
        %556 = vmatprep.subr.bf16.mxu0 0
        %557 = vmatpush1.bf16.msra.mxu0 0
        %558 = vmatprep.subr.bf16.mxu0 0
        %559 = vmatpush1.bf16.msra.mxu0 0
        %560 = vmatprep.subr.bf16.mxu0 0
        %561 = vmatpush1.bf16.msra.mxu0 0
        %562 = vmatprep.mubr.bf16.mxu0 0
        %563 = vmatmul.mubr.bf16.gmra.mrb[0].mxu0 %v524
        %v564 = vpop.f32.mrb[0].mxu0
        %v565 = vadd.f32 0.0, %v564
        %v566 = vpop.f32.mrb[0].mxu0
        %v567 = vpop.f32.mrb[0].mxu0
        %v568 = vpop.f32.mrb[0].mxu0
        %569 = vdwg.mxu0
        %v570 = vadd.f32 %v521, %v565
        %571 = vst [vmem:[#allocation2] sm:$0xf] %v570
        %s572 = scalar_lea.vmem %s3, 2
        %v573 = vld [vmem:[%s572] sm:$0x3]
        %v574 = vld [vmem:[#allocation2] sm:$0xf]
        %v576 = vsel %vm522, %v573, 0
        %v578 = vsel %vm526, %v467, 0
        %580 = vmatprep.subr.bf16.mxu0 0
        %581 = vmatpush1.bf16.msra.mxu0 %v578
        %582 = vmatprep.subr.bf16.mxu0 0
        %583 = vmatpush1.bf16.msra.mxu0 0
        %584 = vmatprep.subr.bf16.mxu0 0
        %585 = vmatpush1.bf16.msra.mxu0 0
        %586 = vmatprep.subr.bf16.mxu0 0
        %587 = vmatpush1.bf16.msra.mxu0 0
        %588 = vmatprep.subr.bf16.mxu0 0
        %589 = vmatpush1.bf16.msra.mxu0 0
        %590 = vmatprep.subr.bf16.mxu0 0
        %591 = vmatpush1.bf16.msra.mxu0 0
        %592 = vmatprep.subr.bf16.mxu0 0
        %593 = vmatpush1.bf16.msra.mxu0 0
        %594 = vmatprep.subr.bf16.mxu0 0
        %595 = vmatpush1.bf16.msra.mxu0 0
        %596 = vmatprep.subr.bf16.mxu0 0
        %597 = vmatpush1.bf16.msra.mxu0 0
        %598 = vmatprep.subr.bf16.mxu0 0
        %599 = vmatpush1.bf16.msra.mxu0 0
        %600 = vmatprep.subr.bf16.mxu0 0
        %601 = vmatpush1.bf16.msra.mxu0 0
        %602 = vmatprep.subr.bf16.mxu0 0
        %603 = vmatpush1.bf16.msra.mxu0 0
        %604 = vmatprep.subr.bf16.mxu0 0
        %605 = vmatpush1.bf16.msra.mxu0 0
        %606 = vmatprep.subr.bf16.mxu0 0
        %607 = vmatpush1.bf16.msra.mxu0 0
        %608 = vmatprep.subr.bf16.mxu0 0
        %609 = vmatpush1.bf16.msra.mxu0 0
        %610 = vmatprep.subr.bf16.mxu0 0
        %611 = vmatpush1.bf16.msra.mxu0 0
        %612 = vmatprep.mubr.bf16.mxu0 0
        %613 = vmatmul.mubr.bf16.gmra.mrb[0].mxu0 %v576
        %v614 = vpop.f32.mrb[0].mxu0
        %v615 = vadd.f32 0.0, %v614
        %v616 = vpop.f32.mrb[0].mxu0
        %v617 = vpop.f32.mrb[0].mxu0
        %v618 = vpop.f32.mrb[0].mxu0
        %619 = vdwg.mxu0
        %v620 = vadd.f32 %v574, %v615
        %621 = vst [vmem:[#allocation2] sm:$0xf] %v620
        %622 = vrot.lane.b32.xlu0 %v467, 127
        %v623 = vpop.permute.xlu0 %622
        %vm624 = vcmask 1039360
        %v626 = vsel %vm624, %v623, 0
        %v628 = vsel %vm506, 1, 0
        %vm629 = vcmp.eq.s32.totalorder %v628, 1
        %vm630 = vmpackc.low %vm629, %vm629
        %v631 = vsel %vm630, 0, %v626
        %s632 = scalar_lea.vmem %s3, 4
        %v633 = vld [vmem:[%s632] sm:$0x3]
        %v634 = vld [vmem:[#allocation2] sm:$0xf]
        %v636 = vsel %vm522, %v633, 0
        %v639 = vsel %vm526, %v631, 0
        %641 = vmatprep.subr.bf16.mxu0 0
        %642 = vmatpush1.bf16.msra.mxu0 %v639
        %643 = vmatprep.subr.bf16.mxu0 0
        %644 = vmatpush1.bf16.msra.mxu0 0
        %645 = vmatprep.subr.bf16.mxu0 0
        %646 = vmatpush1.bf16.msra.mxu0 0
        %647 = vmatprep.subr.bf16.mxu0 0
        %648 = vmatpush1.bf16.msra.mxu0 0
        %649 = vmatprep.subr.bf16.mxu0 0
        %650 = vmatpush1.bf16.msra.mxu0 0
        %651 = vmatprep.subr.bf16.mxu0 0
        %652 = vmatpush1.bf16.msra.mxu0 0
        %653 = vmatprep.subr.bf16.mxu0 0
        %654 = vmatpush1.bf16.msra.mxu0 0
        %655 = vmatprep.subr.bf16.mxu0 0
        %656 = vmatpush1.bf16.msra.mxu0 0
        %657 = vmatprep.subr.bf16.mxu0 0
        %658 = vmatpush1.bf16.msra.mxu0 0
        %659 = vmatprep.subr.bf16.mxu0 0
        %660 = vmatpush1.bf16.msra.mxu0 0
        %661 = vmatprep.subr.bf16.mxu0 0
        %662 = vmatpush1.bf16.msra.mxu0 0
        %663 = vmatprep.subr.bf16.mxu0 0
        %664 = vmatpush1.bf16.msra.mxu0 0
        %665 = vmatprep.subr.bf16.mxu0 0
        %666 = vmatpush1.bf16.msra.mxu0 0
        %667 = vmatprep.subr.bf16.mxu0 0
        %668 = vmatpush1.bf16.msra.mxu0 0
        %669 = vmatprep.subr.bf16.mxu0 0
        %670 = vmatpush1.bf16.msra.mxu0 0
        %671 = vmatprep.subr.bf16.mxu0 0
        %672 = vmatpush1.bf16.msra.mxu0 0
        %673 = vmatprep.mubr.bf16.mxu0 0
        %674 = vmatmul.mubr.bf16.gmra.mrb[0].mxu0 %v636
        %v675 = vpop.f32.mrb[0].mxu0
        %v676 = vadd.f32 0.0, %v675
        %v677 = vpop.f32.mrb[0].mxu0
        %v678 = vpop.f32.mrb[0].mxu0
        %v679 = vpop.f32.mrb[0].mxu0
        %680 = vdwg.mxu0
        %v681 = vadd.f32 %v634, %v676
        %682 = vst [vmem:[#allocation2] sm:$0xf] %v681
        %683 = vrot.lane.b32.xlu0 %v412, 1
        %v684 = vpop.permute.xlu0 %683
        %v686 = vsel %vm511, 0, %v684
        %v688 = vsel %vm518, 0, %v686
        %s689 = scalar_lea.vmem %s3, 6
        %v690 = vld [vmem:[%s689] sm:$0x3]
        %v691 = vld [vmem:[#allocation2] sm:$0xf]
        %v693 = vsel %vm522, %v690, 0
        %v696 = vsel %vm526, %v688, 0
        %698 = vmatprep.subr.bf16.mxu0 0
        %699 = vmatpush1.bf16.msra.mxu0 %v696
        %700 = vmatprep.subr.bf16.mxu0 0
        %701 = vmatpush1.bf16.msra.mxu0 0
        %702 = vmatprep.subr.bf16.mxu0 0
        %703 = vmatpush1.bf16.msra.mxu0 0
        %704 = vmatprep.subr.bf16.mxu0 0
        %705 = vmatpush1.bf16.msra.mxu0 0
        %706 = vmatprep.subr.bf16.mxu0 0
        %707 = vmatpush1.bf16.msra.mxu0 0
        %708 = vmatprep.subr.bf16.mxu0 0
        %709 = vmatpush1.bf16.msra.mxu0 0
        %710 = vmatprep.subr.bf16.mxu0 0
        %711 = vmatpush1.bf16.msra.mxu0 0
        %712 = vmatprep.subr.bf16.mxu0 0
        %713 = vmatpush1.bf16.msra.mxu0 0
        %714 = vmatprep.subr.bf16.mxu0 0
        %715 = vmatpush1.bf16.msra.mxu0 0
        %716 = vmatprep.subr.bf16.mxu0 0
        %717 = vmatpush1.bf16.msra.mxu0 0
        %718 = vmatprep.subr.bf16.mxu0 0
        %719 = vmatpush1.bf16.msra.mxu0 0
        %720 = vmatprep.subr.bf16.mxu0 0
        %721 = vmatpush1.bf16.msra.mxu0 0
        %722 = vmatprep.subr.bf16.mxu0 0
        %723 = vmatpush1.bf16.msra.mxu0 0
        %724 = vmatprep.subr.bf16.mxu0 0
        %725 = vmatpush1.bf16.msra.mxu0 0
        %726 = vmatprep.subr.bf16.mxu0 0
        %727 = vmatpush1.bf16.msra.mxu0 0
        %728 = vmatprep.subr.bf16.mxu0 0
        %729 = vmatpush1.bf16.msra.mxu0 0
        %730 = vmatprep.mubr.bf16.mxu0 0
        %731 = vmatmul.mubr.bf16.gmra.mrb[0].mxu0 %v693
        %v732 = vpop.f32.mrb[0].mxu0
        %v733 = vadd.f32 0.0, %v732
        %v734 = vpop.f32.mrb[0].mxu0
        %v735 = vpop.f32.mrb[0].mxu0
        %v736 = vpop.f32.mrb[0].mxu0
        %737 = vdwg.mxu0
        %v738 = vadd.f32 %v691, %v733
        %739 = vst [vmem:[#allocation2] sm:$0xf] %v738
        %s740 = scalar_lea.vmem %s3, 8
        %v741 = vld [vmem:[%s740] sm:$0x3]
        %v742 = vld [vmem:[#allocation2] sm:$0xf]
        %v744 = vsel %vm522, %v741, 0
        %v747 = vsel %vm526, %v412, 0
        %749 = vmatprep.subr.bf16.mxu0 0
        %750 = vmatpush1.bf16.msra.mxu0 %v747
        %751 = vmatprep.subr.bf16.mxu0 0
        %752 = vmatpush1.bf16.msra.mxu0 0
        %753 = vmatprep.subr.bf16.mxu0 0
        %754 = vmatpush1.bf16.msra.mxu0 0
        %755 = vmatprep.subr.bf16.mxu0 0
        %756 = vmatpush1.bf16.msra.mxu0 0
        %757 = vmatprep.subr.bf16.mxu0 0
        %758 = vmatpush1.bf16.msra.mxu0 0
        %759 = vmatprep.subr.bf16.mxu0 0
        %760 = vmatpush1.bf16.msra.mxu0 0
        %761 = vmatprep.subr.bf16.mxu0 0
        %762 = vmatpush1.bf16.msra.mxu0 0
        %763 = vmatprep.subr.bf16.mxu0 0
        %764 = vmatpush1.bf16.msra.mxu0 0
        %765 = vmatprep.subr.bf16.mxu0 0
        %766 = vmatpush1.bf16.msra.mxu0 0
        %767 = vmatprep.subr.bf16.mxu0 0
        %768 = vmatpush1.bf16.msra.mxu0 0
        %769 = vmatprep.subr.bf16.mxu0 0
        %770 = vmatpush1.bf16.msra.mxu0 0
        %771 = vmatprep.subr.bf16.mxu0 0
        %772 = vmatpush1.bf16.msra.mxu0 0
        %773 = vmatprep.subr.bf16.mxu0 0
        %774 = vmatpush1.bf16.msra.mxu0 0
        %775 = vmatprep.subr.bf16.mxu0 0
        %776 = vmatpush1.bf16.msra.mxu0 0
        %777 = vmatprep.subr.bf16.mxu0 0
        %778 = vmatpush1.bf16.msra.mxu0 0
        %779 = vmatprep.subr.bf16.mxu0 0
        %780 = vmatpush1.bf16.msra.mxu0 0
        %781 = vmatprep.mubr.bf16.mxu0 0
        %782 = vmatmul.mubr.bf16.gmra.mrb[0].mxu0 %v744
        %v783 = vpop.f32.mrb[0].mxu0
        %v784 = vadd.f32 0.0, %v783
        %v785 = vpop.f32.mrb[0].mxu0
        %v786 = vpop.f32.mrb[0].mxu0
        %v787 = vpop.f32.mrb[0].mxu0
        %788 = vdwg.mxu0
        %v789 = vadd.f32 %v742, %v784
        %790 = vst [vmem:[#allocation2] sm:$0xf] %v789
        %791 = vrot.lane.b32.xlu0 %v412, 127
        %v792 = vpop.permute.xlu0 %791
        %v794 = vsel %vm624, %v792, 0
        %v796 = vsel %vm630, 0, %v794
        %s797 = scalar_lea.vmem %s3, 10
        %v798 = vld [vmem:[%s797] sm:$0x3]
        %v799 = vld [vmem:[#allocation2] sm:$0xf]
        %v801 = vsel %vm522, %v798, 0
        %v804 = vsel %vm526, %v796, 0
        %806 = vmatprep.subr.bf16.mxu0 0
        %807 = vmatpush1.bf16.msra.mxu0 %v804
        %808 = vmatprep.subr.bf16.mxu0 0
        %809 = vmatpush1.bf16.msra.mxu0 0
        %810 = vmatprep.subr.bf16.mxu0 0
        %811 = vmatpush1.bf16.msra.mxu0 0
        %812 = vmatprep.subr.bf16.mxu0 0
        %813 = vmatpush1.bf16.msra.mxu0 0
        %814 = vmatprep.subr.bf16.mxu0 0
        %815 = vmatpush1.bf16.msra.mxu0 0
        %816 = vmatprep.subr.bf16.mxu0 0
        %817 = vmatpush1.bf16.msra.mxu0 0
        %818 = vmatprep.subr.bf16.mxu0 0
        %819 = vmatpush1.bf16.msra.mxu0 0
        %820 = vmatprep.subr.bf16.mxu0 0
        %821 = vmatpush1.bf16.msra.mxu0 0
        %822 = vmatprep.subr.bf16.mxu0 0
        %823 = vmatpush1.bf16.msra.mxu0 0
        %824 = vmatprep.subr.bf16.mxu0 0
        %825 = vmatpush1.bf16.msra.mxu0 0
        %826 = vmatprep.subr.bf16.mxu0 0
        %827 = vmatpush1.bf16.msra.mxu0 0
        %828 = vmatprep.subr.bf16.mxu0 0
        %829 = vmatpush1.bf16.msra.mxu0 0
        %830 = vmatprep.subr.bf16.mxu0 0
        %831 = vmatpush1.bf16.msra.mxu0 0
        %832 = vmatprep.subr.bf16.mxu0 0
        %833 = vmatpush1.bf16.msra.mxu0 0
        %834 = vmatprep.subr.bf16.mxu0 0
        %835 = vmatpush1.bf16.msra.mxu0 0
        %836 = vmatprep.subr.bf16.mxu0 0
        %837 = vmatpush1.bf16.msra.mxu0 0
        %838 = vmatprep.mubr.bf16.mxu0 0
        %839 = vmatmul.mubr.bf16.gmra.mrb[0].mxu0 %v801
        %v840 = vpop.f32.mrb[0].mxu0
        %v841 = vadd.f32 0.0, %v840
        %v842 = vpop.f32.mrb[0].mxu0
        %v843 = vpop.f32.mrb[0].mxu0
        %v844 = vpop.f32.mrb[0].mxu0
        %845 = vdwg.mxu0
        %v846 = vadd.f32 %v799, %v841
        %847 = vst [vmem:[#allocation2] sm:$0xf] %v846
        %849 = vrot.lane.b32.xlu0 %v490, 1
        %v850 = vpop.permute.xlu0 %849
        %v852 = vsel %vm511, 0, %v850
        %v854 = vsel %vm518, 0, %v852
        %s855 = scalar_lea.vmem %s3, 12
        %v856 = vld [vmem:[%s855] sm:$0x3]
        %v857 = vld [vmem:[#allocation2] sm:$0xf]
        %v859 = vsel %vm522, %v856, 0
        %v862 = vsel %vm526, %v854, 0
        %864 = vmatprep.subr.bf16.mxu0 0
        %865 = vmatpush1.bf16.msra.mxu0 %v862
        %866 = vmatprep.subr.bf16.mxu0 0
        %867 = vmatpush1.bf16.msra.mxu0 0
        %868 = vmatprep.subr.bf16.mxu0 0
        %869 = vmatpush1.bf16.msra.mxu0 0
        %870 = vmatprep.subr.bf16.mxu0 0
        %871 = vmatpush1.bf16.msra.mxu0 0
        %872 = vmatprep.subr.bf16.mxu0 0
        %873 = vmatpush1.bf16.msra.mxu0 0
        %874 = vmatprep.subr.bf16.mxu0 0
        %875 = vmatpush1.bf16.msra.mxu0 0
        %876 = vmatprep.subr.bf16.mxu0 0
        %877 = vmatpush1.bf16.msra.mxu0 0
        %878 = vmatprep.subr.bf16.mxu0 0
        %879 = vmatpush1.bf16.msra.mxu0 0
        %880 = vmatprep.subr.bf16.mxu0 0
        %881 = vmatpush1.bf16.msra.mxu0 0
        %882 = vmatprep.subr.bf16.mxu0 0
        %883 = vmatpush1.bf16.msra.mxu0 0
        %884 = vmatprep.subr.bf16.mxu0 0
        %885 = vmatpush1.bf16.msra.mxu0 0
        %886 = vmatprep.subr.bf16.mxu0 0
        %887 = vmatpush1.bf16.msra.mxu0 0
        %888 = vmatprep.subr.bf16.mxu0 0
        %889 = vmatpush1.bf16.msra.mxu0 0
        %890 = vmatprep.subr.bf16.mxu0 0
        %891 = vmatpush1.bf16.msra.mxu0 0
        %892 = vmatprep.subr.bf16.mxu0 0
        %893 = vmatpush1.bf16.msra.mxu0 0
        %894 = vmatprep.subr.bf16.mxu0 0
        %895 = vmatpush1.bf16.msra.mxu0 0
        %896 = vmatprep.mubr.bf16.mxu0 0
        %897 = vmatmul.mubr.bf16.gmra.mrb[0].mxu0 %v859
        %v898 = vpop.f32.mrb[0].mxu0
        %v899 = vadd.f32 0.0, %v898
        %v900 = vpop.f32.mrb[0].mxu0
        %v901 = vpop.f32.mrb[0].mxu0
        %v902 = vpop.f32.mrb[0].mxu0
        %903 = vdwg.mxu0
        %v904 = vadd.f32 %v857, %v899
        %905 = vst [vmem:[#allocation2] sm:$0xf] %v904
        %s906 = scalar_lea.vmem %s3, 14
        %v907 = vld [vmem:[%s906] sm:$0x3]
        %v908 = vld [vmem:[#allocation2] sm:$0xf]
        %v910 = vsel %vm522, %v907, 0
        %v912 = vsel %vm526, %v490, 0
        %914 = vmatprep.subr.bf16.mxu0 0
        %915 = vmatpush1.bf16.msra.mxu0 %v912
        %916 = vmatprep.subr.bf16.mxu0 0
        %917 = vmatpush1.bf16.msra.mxu0 0
        %918 = vmatprep.subr.bf16.mxu0 0
        %919 = vmatpush1.bf16.msra.mxu0 0
        %920 = vmatprep.subr.bf16.mxu0 0
        %921 = vmatpush1.bf16.msra.mxu0 0
        %922 = vmatprep.subr.bf16.mxu0 0
        %923 = vmatpush1.bf16.msra.mxu0 0
        %924 = vmatprep.subr.bf16.mxu0 0
        %925 = vmatpush1.bf16.msra.mxu0 0
        %926 = vmatprep.subr.bf16.mxu0 0
        %927 = vmatpush1.bf16.msra.mxu0 0
        %928 = vmatprep.subr.bf16.mxu0 0
        %929 = vmatpush1.bf16.msra.mxu0 0
        %930 = vmatprep.subr.bf16.mxu0 0
        %931 = vmatpush1.bf16.msra.mxu0 0
        %932 = vmatprep.subr.bf16.mxu0 0
        %933 = vmatpush1.bf16.msra.mxu0 0
        %934 = vmatprep.subr.bf16.mxu0 0
        %935 = vmatpush1.bf16.msra.mxu0 0
        %936 = vmatprep.subr.bf16.mxu0 0
        %937 = vmatpush1.bf16.msra.mxu0 0
        %938 = vmatprep.subr.bf16.mxu0 0
        %939 = vmatpush1.bf16.msra.mxu0 0
        %940 = vmatprep.subr.bf16.mxu0 0
        %941 = vmatpush1.bf16.msra.mxu0 0
        %942 = vmatprep.subr.bf16.mxu0 0
        %943 = vmatpush1.bf16.msra.mxu0 0
        %944 = vmatprep.subr.bf16.mxu0 0
        %945 = vmatpush1.bf16.msra.mxu0 0
        %946 = vmatprep.mubr.bf16.mxu0 0
        %947 = vmatmul.mubr.bf16.gmra.mrb[0].mxu0 %v910
        %v948 = vpop.f32.mrb[0].mxu0
        %v949 = vadd.f32 0.0, %v948
        %v950 = vpop.f32.mrb[0].mxu0
        %v951 = vpop.f32.mrb[0].mxu0
        %v952 = vpop.f32.mrb[0].mxu0
        %953 = vdwg.mxu0
        %v954 = vadd.f32 %v908, %v949
        %955 = vst [vmem:[#allocation2] sm:$0xf] %v954
        %956 = vrot.lane.b32.xlu0 %v490, 127
        %v957 = vpop.permute.xlu0 %956
        %v959 = vsel %vm624, %v957, 0
        %v961 = vsel %vm630, 0, %v959
        %s962 = scalar_lea.vmem %s3, 16
        %v963 = vld [vmem:[%s962] sm:$0x3]
        %v964 = vld [vmem:[#allocation2] sm:$0xf]
        %v966 = vsel %vm522, %v963, 0
        %v969 = vsel %vm526, %v961, 0
        %971 = vmatprep.subr.bf16.mxu0 0
        %972 = vmatpush1.bf16.msra.mxu0 %v969
        %973 = vmatprep.subr.bf16.mxu0 0
        %974 = vmatpush1.bf16.msra.mxu0 0
        %975 = vmatprep.subr.bf16.mxu0 0
        %976 = vmatpush1.bf16.msra.mxu0 0
        %977 = vmatprep.subr.bf16.mxu0 0
        %978 = vmatpush1.bf16.msra.mxu0 0
        %979 = vmatprep.subr.bf16.mxu0 0
        %980 = vmatpush1.bf16.msra.mxu0 0
        %981 = vmatprep.subr.bf16.mxu0 0
        %982 = vmatpush1.bf16.msra.mxu0 0
        %983 = vmatprep.subr.bf16.mxu0 0
        %984 = vmatpush1.bf16.msra.mxu0 0
        %985 = vmatprep.subr.bf16.mxu0 0
        %986 = vmatpush1.bf16.msra.mxu0 0
        %987 = vmatprep.subr.bf16.mxu0 0
        %988 = vmatpush1.bf16.msra.mxu0 0
        %989 = vmatprep.subr.bf16.mxu0 0
        %990 = vmatpush1.bf16.msra.mxu0 0
        %991 = vmatprep.subr.bf16.mxu0 0
        %992 = vmatpush1.bf16.msra.mxu0 0
        %993 = vmatprep.subr.bf16.mxu0 0
        %994 = vmatpush1.bf16.msra.mxu0 0
        %995 = vmatprep.subr.bf16.mxu0 0
        %996 = vmatpush1.bf16.msra.mxu0 0
        %997 = vmatprep.subr.bf16.mxu0 0
        %998 = vmatpush1.bf16.msra.mxu0 0
        %999 = vmatprep.subr.bf16.mxu0 0
        %1000 = vmatpush1.bf16.msra.mxu0 0
        %1001 = vmatprep.subr.bf16.mxu0 0
        %1002 = vmatpush1.bf16.msra.mxu0 0
        %1003 = vmatprep.mubr.bf16.mxu0 0
        %1004 = vmatmul.mubr.bf16.gmra.mrb[0].mxu0 %v966
        %v1005 = vpop.f32.mrb[0].mxu0
        %v1006 = vadd.f32 0.0, %v1005
        %v1007 = vpop.f32.mrb[0].mxu0
        %v1008 = vpop.f32.mrb[0].mxu0
        %v1009 = vpop.f32.mrb[0].mxu0
        %1010 = vdwg.mxu0
        %v1011 = vadd.f32 %v964, %v1006
        %1012 = vst [vmem:[#allocation2] sm:$0xf] %v1011
        %v1013 = vld [vmem:[#allocation2] sm:$0xf]
        %v1014 = vld [vmem:[%s4] sm:$0xf]
        %1016 = vset.pattern.permute.xlu0 0
        %1017 = vperm.xlu0 %1016, %v1014
        %v1018 = vpop.permute.xlu0 %1017
        %v1020 = vadd.f32 %v1013, %v1018
        %v1021 = vmax.f32 %v1020, 0.0
        %v1022 = vld [vmem:[%s5] sm:$0xf]
        %v1023 = vld [vmem:[%s5 + $0x4] sm:$0x1]
        %v1024 = vpack.c.bf16 %v1021, %v1021
        %v1025 = vld [vmem:[%s6] sm:$0xff]
        %v1026 = vld [vmem:[%s6 + $0x8] sm:$0x1]
        %1028 = vset.pattern.permute.xlu0 0
        %1029 = vperm.xlu0 %1028, %v1025
        %v1030 = vpop.permute.xlu0 %1029
        %1033 = vset.pattern.permute.xlu0 0
        %1034 = vperm.xlu0 %1033, %v1026
        %v1035 = vpop.permute.xlu0 %1034
        %v1039 = vunpack.c.l.b16 %v1022
        %v1040 = vunpack.c.l.b16 %v1023
        %v1041 = vpack.c.b16 %v1040, %v1039
        %v1043 = vsel %vm522, %v1041, 0
        %v1046 = vsel %vm526, %v1024, 0
        %1048 = vmatprep.subr.bf16.mxu0 0
        %1049 = vmatpush1.bf16.msra.mxu0 %v1046
        %1050 = vmatprep.subr.bf16.mxu0 0
        %1051 = vmatpush1.bf16.msra.mxu0 0
        %1052 = vmatprep.subr.bf16.mxu0 0
        %1053 = vmatpush1.bf16.msra.mxu0 0
        %1054 = vmatprep.subr.bf16.mxu0 0
        %1055 = vmatpush1.bf16.msra.mxu0 0
        %1056 = vmatprep.subr.bf16.mxu0 0
        %1057 = vmatpush1.bf16.msra.mxu0 0
        %1058 = vmatprep.subr.bf16.mxu0 0
        %1059 = vmatpush1.bf16.msra.mxu0 0
        %1060 = vmatprep.subr.bf16.mxu0 0
        %1061 = vmatpush1.bf16.msra.mxu0 0
        %1062 = vmatprep.subr.bf16.mxu0 0
        %1063 = vmatpush1.bf16.msra.mxu0 0
        %1064 = vmatprep.subr.bf16.mxu0 0
        %1065 = vmatpush1.bf16.msra.mxu0 0
        %1066 = vmatprep.subr.bf16.mxu0 0
        %1067 = vmatpush1.bf16.msra.mxu0 0
        %1068 = vmatprep.subr.bf16.mxu0 0
        %1069 = vmatpush1.bf16.msra.mxu0 0
        %1070 = vmatprep.subr.bf16.mxu0 0
        %1071 = vmatpush1.bf16.msra.mxu0 0
        %1072 = vmatprep.subr.bf16.mxu0 0
        %1073 = vmatpush1.bf16.msra.mxu0 0
        %1074 = vmatprep.subr.bf16.mxu0 0
        %1075 = vmatpush1.bf16.msra.mxu0 0
        %1076 = vmatprep.subr.bf16.mxu0 0
        %1077 = vmatpush1.bf16.msra.mxu0 0
        %1078 = vmatprep.subr.bf16.mxu0 0
        %1079 = vmatpush1.bf16.msra.mxu0 0
        %1080 = vmatprep.mubr.bf16.mxu0 0
        %1081 = vmatmul.mubr.bf16.gmra.mrb[0].mxu0 %v1043
        %v1082 = vpop.f32.mrb[0].mxu0
        %v1083 = vadd.f32 %v1030, %v1082
        %v1084 = vpop.f32.mrb[0].mxu0
        %v1085 = vpop.f32.mrb[0].mxu0
        %v1086 = vadd.f32 %v1035, %v1085
        %v1087 = vpop.f32.mrb[0].mxu0
        %1088 = vdwg.mxu0
        %1089 = vst [vmem:[%s393] sm:$0xff] %v1083
        %1090 = vst [vmem:[%s393 + $0x8] sm:$0x1] %v1086
        %s1091 = sand.u32 %s226, 1
        %s1092 = sand.u32 %s226, 1
        %s1093 = smul.addr %s1092, 16
        %s1094 = scalar_lea.vmem [#allocation7], %s1093
        // Predicated region
        $region57: #{tpu_custom_call.1} parent=47 // pred_check
          %p1095 = pneg %p236
        $region58: #{tpu_custom_call.1} parent=47 // pred_check_branch
          %1097 = sbr.rel (%p1095) target = $region60
        $region59: #{tpu_custom_call.1} parent=47 // pred_region
          %s1098 = smul.addr %s28, 4
          %s1099 = sadd.s32 %s29, %s1098
          %s1100 = smul.addr %s1099, 8
          %s1101 = scalar_lea.vmem %s7, %s1100
          // Predicated region
          $region61: #{tpu_custom_call.1} parent=59 // pred_check
            _
          $region62: #{tpu_custom_call.1} parent=59 // pred_check_branch
            %1103 = sbr.rel (0) target = $region64
          $region63: #{tpu_custom_call.1} parent=59 // pred_region
            // Predicated region
            $region65: #{tpu_custom_call.1} parent=63 // pred_check
              _
            $region66: #{tpu_custom_call.1} parent=63 // pred_check_branch
              %1105 = sbr.rel (0) target = $region68
            $region67: #{tpu_custom_call.1} parent=63 // pred_region
              // Predicated region
              $region80: #{tpu_custom_call.1} parent=67 // pred_check
                _
              $region81: #{tpu_custom_call.1} parent=67 // pred_check_branch
                %1122 = sbr.rel (0) target = $region83
              $region82: #{tpu_custom_call.1} parent=67 // pred_region
                loop: start=0, step=1, limit=1
                $region84: #{tpu_custom_call.1} parent=82 // loop_pre_header
                  _
                $region85: #{tpu_custom_call.1} parent=82 // loop_header
                  %s1124 = sphi 0, %s1128
                  %p1125 = scmp.ge.s32.totalorder %s1124, 1
                  %s1129 = sphi %s1094, %s1094
                  %s1130 = sphi %s1101, %s1101
                $region86: #{tpu_custom_call.1} parent=82 // loop_header_branch
                  %1127 = sbr.rel (%p1125) target = $region90
                $region87: #{tpu_custom_call.1} parent=82 // loop_body
                  %v1131 = vld [vmem:[%s1129] sm:$0xff]
                  %1132 = vst [vmem:[%s1130] sm:$0xff] %v1131
                  %v1133 = vld [vmem:[%s1129 + $0x8] sm:$0xff]
                  %1134 = vst [vmem:[%s1130 + $0x10] sm:$0xff] %v1133
                $region88: #{tpu_custom_call.1} parent=82 // loop_footer
                  %s1128 = sadd.s32 1, %s1124
                $region89: #{tpu_custom_call.1} parent=82 // loop_footer_branch
                  %1123 = sbr.rel target = $region85
                $region90: #{tpu_custom_call.1} parent=82 // loop_exit
                  _
              $region83: #{tpu_custom_call.1} parent=67 // pred_fallthru
                _
              // Predicated region
              $region91: #{tpu_custom_call.1} parent=67 // pred_check
                _
              $region92: #{tpu_custom_call.1} parent=67 // pred_check_branch
                %1136 = sbr.rel target = $region94
              $region93: #{tpu_custom_call.1} parent=67 // pred_region
                _
              $region94: #{tpu_custom_call.1} parent=67 // pred_fallthru
                _
            $region68: #{tpu_custom_call.1} parent=63 // pred_fallthru
              _
            // Predicated region
            $region69: #{tpu_custom_call.1} parent=63 // pred_check
              _
            $region70: #{tpu_custom_call.1} parent=63 // pred_check_branch
              %1107 = sbr.rel target = $region72
            $region71: #{tpu_custom_call.1} parent=63 // pred_region
              loop: start=0, step=1, limit=1
              $region73: #{tpu_custom_call.1} parent=71 // loop_pre_header
                _
              $region74: #{tpu_custom_call.1} parent=71 // loop_header
                %s1110 = sphi 0, %s1114
                %p1111 = scmp.ge.s32.totalorder %s1110, 1
                %s1115 = sphi %s1094, %s1094
                %s1116 = sphi %s1101, %s1101
              $region75: #{tpu_custom_call.1} parent=71 // loop_header_branch
                %1113 = sbr.rel (%p1111) target = $region79
              $region76: #{tpu_custom_call.1} parent=71 // loop_body
                %v1117 = vld [vmem:[%s1115] sm:$0xff]
                %1118 = vst [vmem:[%s1116] sm:$0xff] %v1117
                %v1119 = vld [vmem:[%s1115 + $0x8] sm:$0xff]
                %1120 = vst [vmem:[%s1116 + $0x10] sm:$0xff] %v1119
              $region77: #{tpu_custom_call.1} parent=71 // loop_footer
                %s1114 = sadd.s32 1, %s1110
              $region78: #{tpu_custom_call.1} parent=71 // loop_footer_branch
                %1109 = sbr.rel target = $region74
              $region79: #{tpu_custom_call.1} parent=71 // loop_exit
                _
            $region72: #{tpu_custom_call.1} parent=63 // pred_fallthru
              _
          $region64: #{tpu_custom_call.1} parent=59 // pred_fallthru
            _
          %1137 = vnop
        $region60: #{tpu_custom_call.1} parent=47 // pred_fallthru
          _
      $region48: #{tpu_custom_call.1} parent=5 // pred_fallthru
        _
      %p1138 = scmp.le.s32.totalorder 2, %s19
      // Predicated region
      $region95: #{tpu_custom_call.1} parent=5 // pred_check
        %p1139 = pneg %p1138
      $region96: #{tpu_custom_call.1} parent=5 // pred_check_branch
        %1141 = sbr.rel (%p1139) target = $region98
      $region97: #{tpu_custom_call.1} parent=5 // pred_region
        %s1142 = ssub.s32 %s19, 2
        // Predicated region
        $region99: #{tpu_custom_call.1} parent=97 // pred_check
          %p1143 = pneg %p242
        $region100: #{tpu_custom_call.1} parent=97 // pred_check_branch
          %1145 = sbr.rel (%p1143) target = $region102
        $region101: #{tpu_custom_call.1} parent=97 // pred_region
          %s1146 = sand.u32 %s227, 1
          %s1147 = sand.u32 %s227, 1
          %s1148 = smul.addr %s1147, 16
          %s1149 = scalar_lea.vmem [#allocation7], %s1148
        $region102: #{tpu_custom_call.1} parent=97 // pred_fallthru
          _
      $region98: #{tpu_custom_call.1} parent=5 // pred_fallthru
        _
    $region6: #{tpu_custom_call.1} parent=1 // loop_footer
      %s23 = sadd.s32 1, %s19
    $region7: #{tpu_custom_call.1} parent=1 // loop_footer_branch
      %18 = sbr.rel target = $region3
    $region8: #{tpu_custom_call.1} parent=1 // loop_exit
      _
    %1150 = vsyncpa [#allocation4], 1
    %s1151 = scalar_lea.sflag [#allocation4], 1
    %1152 = vsyncpa %s1151, 1
    %1153 = vsyncpa [#allocation6], 1
    %s1154 = scalar_lea.sflag [#allocation6], 1
    %1155 = vsyncpa %s1154, 1

</llo_original>
